<compile_context>
chip_gen: v6e
topology: v6e:2x2x1
jax: 0.10.0
libtpu: 0.0.40
codegen_flags: <defaults>
</compile_context>

<pallas_src>
import functools

import jax
import jax.numpy as jnp
from jax import lax
from jax.experimental import pallas as pl
from jax.experimental.pallas import tpu as pltpu


# ----------------------------------------------------------------------------
# Parameter construction (glue, plain JAX; PyTorch-default-like uniform init).
# ----------------------------------------------------------------------------
def _uniform(key, shape, k):
    return jax.random.uniform(key, shape, jnp.float32, minval=-k, maxval=k)


def linear_params(key, fan_in, fan_out):
    kw, kb = jax.random.split(key)
    k = 1.0 / (fan_in ** 0.5)
    return _uniform(kw, (fan_in, fan_out), k), _uniform(kb, (1, fan_out), k)


def block_diag_params(key, in_f, out_f, nb):
    """Dense (in_f, out_f) matrix with block-diagonal structure == BlockDiagonal."""
    bi, bo = in_f // nb, out_f // nb
    k = 1.0 / (bi ** 0.5)
    W = jnp.zeros((in_f, out_f), jnp.float32)
    biases = []
    keys = jax.random.split(key, 2 * nb)
    for j in range(nb):
        Wj = _uniform(keys[2 * j], (bi, bo), k)
        bj = _uniform(keys[2 * j + 1], (bo,), k)
        W = W.at[j * bi:(j + 1) * bi, j * bo:(j + 1) * bo].set(Wj)
        biases.append(bj)
    return W, jnp.concatenate(biases).reshape(1, out_f)


def causal_conv_params(key, ksize=4):
    """Raw CausalConv1D(1,1,4) weights: (4,) taps + scalar bias."""
    kw, kb = jax.random.split(key)
    k = 1.0 / (1 * ksize) ** 0.5
    return _uniform(kw, (ksize,), k), _uniform(kb, (), k)


def build_params(key, D, H, NH, NC, proj_factor=2):
    P_m = int(D * proj_factor)   # mLSTM up-proj size
    p = {}
    keys = iter(jax.random.split(key, 64))

    # ---------------- sLSTM block ----------------
    p["s_ln_g"], p["s_ln_b"] = jnp.ones((1, D)), jnp.zeros((1, D))
    p["s_conv_w"], p["s_conv_b"] = causal_conv_params(next(keys))
    for nm, fi, fo in [("s_Wz", D, H), ("s_Wi", D, H), ("s_Wf", D, H), ("s_Wo", D, H),
                       ("s_Rz", H, H), ("s_Ri", H, H), ("s_Rf", H, H), ("s_Ro", H, H)]:
        p[nm + "_w"], p[nm + "_b"] = block_diag_params(next(keys), fi, fo, NH)
    p["s_gn_g"], p["s_gn_b"] = jnp.ones((1, H)), jnp.zeros((1, H))
    p["s_upl_w"], p["s_upl_b"] = linear_params(next(keys), H, int(H * proj_factor))
    p["s_upr_w"], p["s_upr_b"] = linear_params(next(keys), H, int(H * proj_factor))
    p["s_dn_w"], p["s_dn_b"] = linear_params(next(keys), int(H * proj_factor), D)

    # ---------------- mLSTM block ----------------
    p["m_ln_g"], p["m_ln_b"] = jnp.ones((1, D)), jnp.zeros((1, D))
    p["m_upl_w"], p["m_upl_b"] = linear_params(next(keys), D, P_m)
    p["m_upr_w"], p["m_upr_b"] = linear_params(next(keys), D, H)
    p["m_skip_w"], p["m_skip_b"] = linear_params(next(keys), P_m, H)
    p["m_dn_w"], p["m_dn_b"] = linear_params(next(keys), H, D)
    p["m_conv_w"], p["m_conv_b"] = causal_conv_params(next(keys))
    for nm in ["m_Wq", "m_Wk", "m_Wv"]:
        p[nm + "_w"], p[nm + "_b"] = block_diag_params(next(keys), P_m, H, NH)
    for nm in ["m_Wi", "m_Wf", "m_Wo"]:
        p[nm + "_w"], p[nm + "_b"] = linear_params(next(keys), P_m, H)
    p["m_gn_g"], p["m_gn_b"] = jnp.ones((1, H)), jnp.zeros((1, H))

    # ---------------- classifier ----------------
    p["cls_w"], p["cls_b"] = linear_params(next(keys), H, NC)
    return p


def groupnorm_mats(H, NH):
    """One-hot group matrices so GroupNorm is a few tiny matmuls (no relayout)."""
    gs = H // NH
    ch = jnp.arange(H)
    G = (ch[:, None] // gs == jnp.arange(NH)[None, :]).astype(jnp.float32)  # (H, NH)
    return G / gs, G.T                                                      # Gdiv, GT


# ----------------------------------------------------------------------------
# In-kernel math helpers (values, not refs)
# ----------------------------------------------------------------------------
def _dot(a, b):
    return jnp.dot(a, b, preferred_element_type=jnp.float32)


def _silu(x):
    return x * jax.nn.sigmoid(x)


def _gelu(x):  # exact (erf) GELU, matches F.gelu default
    return 0.5 * x * (1.0 + lax.erf(x * 0.7071067811865476))


def _layernorm(x, g, b, eps=1e-5):
    mu = jnp.mean(x, axis=-1, keepdims=True)
    var = jnp.mean((x - mu) ** 2, axis=-1, keepdims=True)
    return (x - mu) * lax.rsqrt(var + eps) * g + b


def _groupnorm_mm(x, gdiv, gt, gamma, beta, eps=1e-5):
    mean = _dot(_dot(x, gdiv), gt)          # per-group mean, broadcast to channels
    d = x - mean
    var = _dot(_dot(d * d, gdiv), gt)       # E[(x-mean)^2] (no cancellation)
    return d * lax.rsqrt(var + eps) * gamma + beta


def _causal_conv4(x, w0, w1, w2, w3, b):
    """y[:, d] = b + w3*x[:,d] + w2*x[:,d-1] + w1*x[:,d-2] + w0*x[:,d-3]."""
    n = x.shape[-1]
    z = jnp.zeros_like(x[:, 0:1])
    x1 = jnp.concatenate([z, x[:, :n - 1]], axis=-1)
    x2 = jnp.concatenate([z, x1[:, :n - 1]], axis=-1)
    x3 = jnp.concatenate([z, x2[:, :n - 1]], axis=-1)
    return x * w3 + x1 * w2 + x2 * w1 + x3 * w0 + b


# ----------------------------------------------------------------------------
# Kernel 1: batched precompute of every x-only projection (row-tiled grid).
# ----------------------------------------------------------------------------
def precompute_kernel(conv_ref, x_ref, s_ln_ref, wzo_ref, bzo_ref, wif_ref, bif_ref,
                      m_ln_ref, mupl_w_ref, mupl_b_ref, wmc_ref, bmc_ref,
                      wml_ref, bml_ref, pre_s_ref, pre_m_ref, *, H):
    bf16 = jnp.bfloat16
    x = x_ref[...]                                                 # (TILE, D) f32

    # ----- sLSTM x-path -----
    xn = _layernorm(x, s_ln_ref[0:1, :], s_ln_ref[1:2, :])
    xc = _silu(_causal_conv4(xn, conv_ref[0], conv_ref[1], conv_ref[2],
                             conv_ref[3], conv_ref[4]))
    zo = _dot(x.astype(bf16), wzo_ref[...]) + bzo_ref[...]         # [z | o]
    iff = _dot(xc.astype(bf16), wif_ref[...]) + bif_ref[...]       # [i | f]
    pre_s_ref[...] = jnp.concatenate([zo, iff], axis=-1).astype(pre_s_ref.dtype)

    # ----- mLSTM x-path -----
    xnm = _layernorm(x, m_ln_ref[0:1, :], m_ln_ref[1:2, :])
    x_left = _dot(xnm.astype(bf16), mupl_w_ref[...]) + mupl_b_ref[...]   # (TILE, P_m)
    xcm = _silu(_causal_conv4(x_left, conv_ref[5], conv_ref[6], conv_ref[7],
                              conv_ref[8], conv_ref[9]))
    qkif = _dot(xcm.astype(bf16), wmc_ref[...]) + bmc_ref[...]     # [q|k*s|i|f]
    vo = _dot(x_left.astype(bf16), wml_ref[...]) + bml_ref[...]    # [v|o]
    pre_m_ref[...] = jnp.concatenate(
        [qkif, vo[:, 0:H], jax.nn.sigmoid(vo[:, H:2 * H])],
        axis=-1).astype(pre_m_ref.dtype)                           # [q|k|i|f|v|sig(o)]


# ----------------------------------------------------------------------------
# Kernel 2: skip-connection + silu(up_proj_right) for the LAST timestep only.
# ----------------------------------------------------------------------------
def last_step_kernel(conv_ref, x_ref, m_ln_ref, upl_w_ref, upl_b_ref,
                     upr_w_ref, upr_b_ref, skip_w_ref, skip_b_ref, extra_ref):
    x = x_ref[...]
    xnm = _layernorm(x, m_ln_ref[0:1, :], m_ln_ref[1:2, :])
    x_left = _dot(xnm, upl_w_ref[...]) + upl_b_ref[...]
    x_right = _dot(xnm, upr_w_ref[...]) + upr_b_ref[...]
    xcm = _silu(_causal_conv4(x_left, conv_ref[5], conv_ref[6], conv_ref[7],
                              conv_ref[8], conv_ref[9]))
    skip = _dot(xcm, skip_w_ref[...]) + skip_b_ref[...]
    extra_ref[...] = jnp.concatenate([skip, _silu(x_right)], axis=-1)


# ----------------------------------------------------------------------------
# Kernel 3: sequential recurrence.  grid = (batch_blocks, time_chunks).
# ----------------------------------------------------------------------------
def recurrent_kernel(pre_s_ref, pre_m_ref, x_last_ref, extra_ref, r4_ref, br4_ref,
                     s_gn_ref, s_up_w_ref, s_up_b_ref, s_dn_w_ref, s_dn_b_ref,
                     m_gn_ref, m_dn_w_ref, m_dn_b_ref, cls_w_ref, cls_b_ref,
                     gdiv_ref, gt_ref, out_ref, state_ref, *, T, H, Ps, S, unroll):
    c = pl.program_id(1)

    @pl.when(c == 0)
    def _():
        state_ref[...] = jnp.zeros(state_ref.shape, state_ref.dtype)

    r4 = r4_ref[...]            # (H, 4H), columns [Rz | Ro | Ri | Rf]
    br4 = br4_ref[...]          # (1, 4H)
    needs_mask = (S % T) != 0   # static

    def step(t, carry):
        h, cc, nn, mm, hs, hm = carry
        ps = pre_s_ref[t].astype(jnp.float32)          # (B, 4H) = [z|o|i|f]
        pm = pre_m_ref[t].astype(jnp.float32)          # (B, 6H) = [q|k|i|f|v|o]

        # ---- sLSTM: one fused recurrent matmul + gates (all f32) ----
        g = ps + _dot(h, r4) + br4
        z = jnp.tanh(g[:, 0:H])
        o_s = jax.nn.sigmoid(g[:, H:2 * H])
        it_s = g[:, 2 * H:3 * H]
        ft_s = g[:, 3 * H:4 * H]
        mt_s = jnp.maximum(ft_s + mm, it_s)
        i_s = jnp.exp(it_s - mt_s)
        f_s = jnp.exp(ft_s + mm - mt_s)
        ct_s = f_s * cc + i_s * z
        nt_s = f_s * nn + i_s
        ht_s = o_s * ct_s / (nt_s + 1e-6)              # exact divide (state path)

        # ---- mLSTM: inputs fully precomputed, pure elementwise here ----
        q = pm[:, 0:H]
        k = pm[:, H:2 * H]
        it_m = pm[:, 2 * H:3 * H]
        ft_m = pm[:, 3 * H:4 * H]
        v = pm[:, 4 * H:5 * H]
        o_m = pm[:, 5 * H:6 * H]
        mt_m = jnp.maximum(ft_m + mm, it_m)
        i_m = jnp.exp(it_m - mt_m)
        f_m = jnp.exp(ft_m + mm - mt_m)
        ct_m = f_m * cc + i_m * (v * k)
        nt_m = f_m * nn + i_m * k
        nq = nt_m * q
        ht_m = o_m * (ct_m * q) * lax.rsqrt(
            jnp.sum(nq * nq, axis=-1, keepdims=True) + 1e-12)

        new = (0.5 * (ht_s + ht_m), 0.5 * (ct_s + ct_m),
               0.5 * (nt_s + nt_m), 0.5 * (mt_s + mt_m), ht_s, ht_m)
        if needs_mask:
            valid = (c * T + t) < S
            new = tuple(jnp.where(valid, nv, ov) for nv, ov in zip(new, carry))
        return new

    zeros = jnp.zeros(state_ref.shape[1:], state_ref.dtype)
    init = (state_ref[0], state_ref[1], state_ref[2], state_ref[3], zeros, zeros)
    h, cc, nn, mm, hs, hm = lax.fori_loop(0, T, step, init, unroll=unroll)
    state_ref[0] = h
    state_ref[1] = cc
    state_ref[2] = nn
    state_ref[3] = mm

    # Output path + classifier only once (only out[-1] is classified).
    @pl.when(c == pl.num_programs(1) - 1)
    def _():
        gdiv = gdiv_ref[...]
        gt = gt_ref[...]
        # sLSTM output path
        gn_s = _groupnorm_mm(hs, gdiv, gt, s_gn_ref[0:1, :], s_gn_ref[1:2, :])
        up = _dot(gn_s, s_up_w_ref[...]) + s_up_b_ref[...]          # [left | right]
        s_core = up[:, 0:Ps] * _gelu(up[:, Ps:2 * Ps])
        s_out = _dot(s_core, s_dn_w_ref[...]) + s_dn_b_ref[...]
        # mLSTM output path
        gn_m = _groupnorm_mm(hm, gdiv, gt, m_gn_ref[0:1, :], m_gn_ref[1:2, :])
        skip = extra_ref[:, 0:H]
        rsilu = extra_ref[:, H:2 * H]
        m_out = _dot((gn_m + skip) * rsilu, m_dn_w_ref[...]) + m_dn_b_ref[...]
        # combine (+x residual shared by both branches) and classify
        x_out = 0.5 * (s_out + m_out) + x_last_ref[...]
        out_ref[...] = _dot(x_out, cls_w_ref[...]) + cls_b_ref[...]


# ----------------------------------------------------------------------------
# Wrapper: parameter fusion/packing + the three pallas_calls.
# ----------------------------------------------------------------------------
def xlstm_classifier_pallas(x, p, *, num_heads, hidden_size, num_classes):
    S, B, D = x.shape
    H = hidden_size
    NH = num_heads
    head_size = H // NH
    Ps = p["s_upl_w"].shape[1]
    f32, bf16 = jnp.float32, jnp.bfloat16
    VMEM_LIMIT = 32 * 1024 * 1024

    # ---- fuse / pack parameters (glue, outside the kernels) ----
    s_ln = jnp.concatenate([p["s_ln_g"], p["s_ln_b"]], axis=0)            # (2, D)
    m_ln = jnp.concatenate([p["m_ln_g"], p["m_ln_b"]], axis=0)
    s_gn = jnp.concatenate([p["s_gn_g"], p["s_gn_b"]], axis=0)            # (2, H)
    m_gn = jnp.concatenate([p["m_gn_g"], p["m_gn_b"]], axis=0)
    wzo = jnp.concatenate([p["s_Wz_w"], p["s_Wo_w"]], axis=1).astype(bf16)
    bzo = jnp.concatenate([p["s_Wz_b"], p["s_Wo_b"]], axis=1)
    wif = jnp.concatenate([p["s_Wi_w"], p["s_Wf_w"]], axis=1).astype(bf16)
    bif = jnp.concatenate([p["s_Wi_b"], p["s_Wf_b"]], axis=1)
    r4 = jnp.concatenate([p["s_Rz_w"], p["s_Ro_w"], p["s_Ri_w"], p["s_Rf_w"]], axis=1)
    br4 = jnp.concatenate([p["s_Rz_b"], p["s_Ro_b"], p["s_Ri_b"], p["s_Rf_b"]], axis=1)
    k_scale = 1.0 / (head_size ** 0.5)      # folded into Wk at pack time
    wmc = jnp.concatenate([p["m_Wq_w"], p["m_Wk_w"] * k_scale,
                           p["m_Wi_w"], p["m_Wf_w"]], axis=1).astype(bf16)
    bmc = jnp.concatenate([p["m_Wq_b"], p["m_Wk_b"] * k_scale,
                           p["m_Wi_b"], p["m_Wf_b"]], axis=1)
    wml = jnp.concatenate([p["m_Wv_w"], p["m_Wo_w"]], axis=1).astype(bf16)
    bml = jnp.concatenate([p["m_Wv_b"], p["m_Wo_b"]], axis=1)
    mupl_w = p["m_upl_w"].astype(bf16)
    s_up_w = jnp.concatenate([p["s_upl_w"], p["s_upr_w"]], axis=1)        # (H, 2Ps)
    s_up_b = jnp.concatenate([p["s_upl_b"], p["s_upr_b"]], axis=1)
    gdiv, gt = groupnorm_mats(H, NH)
    conv_smem = jnp.zeros((16,), f32)
    conv_smem = conv_smem.at[0:4].set(p["s_conv_w"])
    conv_smem = conv_smem.at[4].set(p["s_conv_b"])
    conv_smem = conv_smem.at[5:9].set(p["m_conv_w"])
    conv_smem = conv_smem.at[9].set(p["m_conv_b"])

    # ---- kernel 1: tiled batched precompute over all S*B rows ----
    SB = S * B
    x2 = x.reshape(SB, D)
    TILE = min(SB, 512)
    g1 = pl.cdiv(SB, TILE)
    smem_spec = pl.BlockSpec(memory_space=pltpu.MemorySpace.SMEM)
    w1 = lambda a: pl.BlockSpec(a.shape, lambda i: (0, 0))   # resident weights
    pre_s2, pre_m2 = pl.pallas_call(
        functools.partial(precompute_kernel, H=H),
        out_shape=(jax.ShapeDtypeStruct((SB, 4 * H), bf16),
                   jax.ShapeDtypeStruct((SB, 6 * H), bf16)),
        grid_spec=pltpu.PrefetchScalarGridSpec(
            num_scalar_prefetch=0,
            grid=(g1,),
            in_specs=[smem_spec,
                      pl.BlockSpec((TILE, D), lambda i: (i, 0)),
                      w1(s_ln), w1(wzo), w1(bzo), w1(wif), w1(bif),
                      w1(m_ln), w1(mupl_w), w1(p["m_upl_b"]),
                      w1(wmc), w1(bmc), w1(wml), w1(bml)],
            out_specs=[pl.BlockSpec((TILE, 4 * H), lambda i: (i, 0)),
                       pl.BlockSpec((TILE, 6 * H), lambda i: (i, 0))]),
        compiler_params=pltpu.CompilerParams(
            dimension_semantics=("parallel",),
            vmem_limit_bytes=VMEM_LIMIT),
    )(conv_smem, x2, s_ln, wzo, bzo, wif, bif, m_ln, mupl_w, p["m_upl_b"],
      wmc, bmc, wml, bml)

    pre_s = pre_s2.reshape(S, B, 4 * H)
    pre_m = pre_m2.reshape(S, B, 6 * H)
    x_last = x[S - 1]                           # (B, D)

    # ---- kernel 2: skip + silu(x_right) for the last timestep only ----
    w2 = lambda a: pl.BlockSpec(a.shape, lambda i: (0, 0))
    extra = pl.pallas_call(
        last_step_kernel,
        out_shape=jax.ShapeDtypeStruct((B, 2 * H), f32),
        grid_spec=pltpu.PrefetchScalarGridSpec(
            num_scalar_prefetch=0,
            grid=(1,),
            in_specs=[smem_spec, w2(x_last), w2(m_ln),
                      w2(p["m_upl_w"]), w2(p["m_upl_b"]),
                      w2(p["m_upr_w"]), w2(p["m_upr_b"]),
                      w2(p["m_skip_w"]), w2(p["m_skip_b"])],
            out_specs=pl.BlockSpec((B, 2 * H), lambda i: (0, 0))),
        compiler_params=pltpu.CompilerParams(
            dimension_semantics=("arbitrary",),
            vmem_limit_bytes=VMEM_LIMIT),
    )(conv_smem, x_last, m_ln, p["m_upl_w"], p["m_upl_b"],
      p["m_upr_w"], p["m_upr_b"], p["m_skip_w"], p["m_skip_b"])

    # ---- kernel 3: sequential recurrence over (batch blocks, time chunks) ----
    nb = 2 if (B % 16 == 0) else 1        # split batch across TCs when legal (v7x)
    Bb = B // nb
    stream_bytes_per_t = Bb * (4 * H + 6 * H) * 2          # bf16 streams
    budget = 8 * 1024 * 1024                               # stream VMEM budget
    T = max(1, min(S, budget // max(1, 2 * stream_bytes_per_t), 512))
    n_chunks = pl.cdiv(S, T)
    unroll = min(T, 4)

    consts = [x_last, extra, r4, br4, s_gn, s_up_w, s_up_b, p["s_dn_w"], p["s_dn_b"],
              m_gn, p["m_dn_w"], p["m_dn_b"], p["cls_w"], p["cls_b"], gdiv, gt]
    cw = lambda a: pl.BlockSpec(a.shape, lambda b, c: (0, 0))            # resident
    cb = lambda a: pl.BlockSpec((Bb,) + a.shape[1:], lambda b, c: (b, 0))  # batched
    in_specs = [pl.BlockSpec((T, Bb, 4 * H), lambda b, c: (c, b, 0)),
                pl.BlockSpec((T, Bb, 6 * H), lambda b, c: (c, b, 0)),
                cb(x_last), cb(extra)] + [cw(a) for a in consts[2:]]

    rec_fn = functools.partial(recurrent_kernel, T=T, H=H, Ps=Ps, S=S, unroll=unroll)
    return pl.pallas_call(
        rec_fn,
        out_shape=jax.ShapeDtypeStruct((B, num_classes), f32),
        grid_spec=pltpu.PrefetchScalarGridSpec(
            num_scalar_prefetch=0,
            grid=(nb, n_chunks),
            in_specs=in_specs,
            out_specs=pl.BlockSpec((Bb, num_classes), lambda b, c: (b, 0)),
            scratch_shapes=[pltpu.VMEM((4, Bb, H), f32)]),     # h, c, n, m
        compiler_params=pltpu.CompilerParams(
            dimension_semantics=("parallel", "arbitrary"),
            vmem_limit_bytes=VMEM_LIMIT),
    )(pre_s, pre_m, *consts)


# ----------------------------------------------------------------------------
# Pure-JAX reference (mirrors the PyTorch forward; used to sanity-check)
# ----------------------------------------------------------------------------
def _ref_conv(v, w, b):
    N = v.shape[-1]
    vp = jnp.pad(v, ((0, 0), (3, 0)))
    return b + w[0] * vp[:, 0:N] + w[1] * vp[:, 1:N + 1] \
             + w[2] * vp[:, 2:N + 2] + w[3] * vp[:, 3:N + 3]


def ref_forward(x, p, *, num_heads):
    S, B, D = x.shape
    H = p["cls_w"].shape[0]
    head_size = H // num_heads
    silu = lambda v: v * jax.nn.sigmoid(v)
    gelu = lambda v: 0.5 * v * (1.0 + lax.erf(v / jnp.sqrt(2.0)))
    ln = lambda v, g, b: (v - v.mean(-1, keepdims=True)) / jnp.sqrt(
        v.var(-1, keepdims=True) + 1e-5) * g + b

    def gn(v, g, b):
        vg = v.reshape(B, num_heads, H // num_heads)
        mu = vg.mean(-1, keepdims=True)
        var = ((vg - mu) ** 2).mean(-1, keepdims=True)
        return ((vg - mu) / jnp.sqrt(var + 1e-5)).reshape(B, H) * g + b

    lin = lambda v, w, b: v @ w + b

    h = c = n = m = jnp.zeros((B, H), jnp.float32)
    x_out = None
    for t in range(S):
        xt = x[t]
        # sLSTM
        xn = ln(xt, p["s_ln_g"], p["s_ln_b"])
        xc = silu(_ref_conv(xn, p["s_conv_w"], p["s_conv_b"]))
        z = jnp.tanh(lin(xt, p["s_Wz_w"], p["s_Wz_b"]) + lin(h, p["s_Rz_w"], p["s_Rz_b"]))
        o_s = jax.nn.sigmoid(lin(xt, p["s_Wo_w"], p["s_Wo_b"]) + lin(h, p["s_Ro_w"], p["s_Ro_b"]))
        it = lin(xc, p["s_Wi_w"], p["s_Wi_b"]) + lin(h, p["s_Ri_w"], p["s_Ri_b"])
        ft = lin(xc, p["s_Wf_w"], p["s_Wf_b"]) + lin(h, p["s_Rf_w"], p["s_Rf_b"])
        mt_s = jnp.maximum(ft + m, it)
        i_s, f_s = jnp.exp(it - mt_s), jnp.exp(ft + m - mt_s)
        ct_s = f_s * c + i_s * z
        nt_s = f_s * n + i_s
        ht_s = o_s * ct_s / (nt_s + 1e-6)
        g_s = gn(ht_s, p["s_gn_g"], p["s_gn_b"])
        up = lin(g_s, p["s_upl_w"], p["s_upl_b"]) * gelu(lin(g_s, p["s_upr_w"], p["s_upr_b"]))
        s_out = lin(up, p["s_dn_w"], p["s_dn_b"]) + xt
        # mLSTM
        xn_m = ln(xt, p["m_ln_g"], p["m_ln_b"])
        xl = lin(xn_m, p["m_upl_w"], p["m_upl_b"])
        xr = lin(xn_m, p["m_upr_w"], p["m_upr_b"])
        xcm = silu(_ref_conv(xl, p["m_conv_w"], p["m_conv_b"]))
        xskip = lin(xcm, p["m_skip_w"], p["m_skip_b"])
        q = lin(xcm, p["m_Wq_w"], p["m_Wq_b"])
        k = lin(xcm, p["m_Wk_w"], p["m_Wk_b"]) / (head_size ** 0.5)
        v = lin(xl, p["m_Wv_w"], p["m_Wv_b"])
        itm = lin(xcm, p["m_Wi_w"], p["m_Wi_b"])
        ftm = lin(xcm, p["m_Wf_w"], p["m_Wf_b"])
        o_m = jax.nn.sigmoid(lin(xl, p["m_Wo_w"], p["m_Wo_b"]))
        mt_m = jnp.maximum(ftm + m, itm)
        i_m, f_m = jnp.exp(itm - mt_m), jnp.exp(ftm + m - mt_m)
        ct_m = f_m * c + i_m * (v * k)
        nt_m = f_m * n + i_m * k
        ht_m = o_m * (ct_m * q) / (jnp.linalg.norm(nt_m * q, axis=-1, keepdims=True) + 1e-6)
        g_m = gn(ht_m, p["m_gn_g"], p["m_gn_b"])
        m_out = lin((g_m + xskip) * silu(xr), p["m_dn_w"], p["m_dn_b"]) + xt
        # combine
        x_out = 0.5 * (s_out + m_out)
        h, c = 0.5 * (ht_s + ht_m), 0.5 * (ct_s + ct_m)
        n, m = 0.5 * (nt_s + nt_m), 0.5 * (mt_s + mt_m)
    return x_out @ p["cls_w"] + p["cls_b"]


# ----------------------------------------------------------------------------
if __name__ == "__main__":
    SEQ, BATCH = 8, 2
    INPUT_SIZE = HIDDEN_SIZE = 32          # classifier(Linear(H, C)) applied to out
    NUM_HEADS, NUM_CLASSES = 4, 10         # => input_size must equal hidden_size

    key = jax.random.PRNGKey(0)
    kx, kp = jax.random.split(key)
    x = jax.random.normal(kx, (SEQ, BATCH, INPUT_SIZE), jnp.float32)
    params = build_params(kp, INPUT_SIZE, HIDDEN_SIZE, NUM_HEADS, NUM_CLASSES,
                          proj_factor=2)

    logits = xlstm_classifier_pallas(x, params, num_heads=NUM_HEADS,
                                     hidden_size=HIDDEN_SIZE,
                                     num_classes=NUM_CLASSES)
    logits = jax.block_until_ready(logits)

    ref = ref_forward(x, params, num_heads=NUM_HEADS)
    max_err = float(jnp.max(jnp.abs(logits - ref)))
    assert logits.shape == (BATCH, NUM_CLASSES)
    # Tolerance accounts for bf16 matmul operands + bf16 inter-phase streams.
    assert max_err < 1e-1, f"kernel/reference mismatch: max abs err {max_err}"

    print("KERNEL_OK")
</pallas_src>

<mosaic_0001>
module attributes {stable_mosaic.version = 11 : i64} {
  func.func @precompute_kernel(%arg0: i32, %arg1: memref<16xf32, #tpu.memory_space<smem>>, %arg2: memref<16x32xf32, #tpu.memory_space<vmem>>, %arg3: memref<2x32xf32, #tpu.memory_space<vmem>>, %arg4: memref<32x64xbf16, #tpu.memory_space<vmem>>, %arg5: memref<1x64xf32, #tpu.memory_space<vmem>>, %arg6: memref<32x64xbf16, #tpu.memory_space<vmem>>, %arg7: memref<1x64xf32, #tpu.memory_space<vmem>>, %arg8: memref<2x32xf32, #tpu.memory_space<vmem>>, %arg9: memref<32x64xbf16, #tpu.memory_space<vmem>>, %arg10: memref<1x64xf32, #tpu.memory_space<vmem>>, %arg11: memref<64x128xbf16, #tpu.memory_space<vmem>>, %arg12: memref<1x128xf32, #tpu.memory_space<vmem>>, %arg13: memref<64x64xbf16, #tpu.memory_space<vmem>>, %arg14: memref<1x64xf32, #tpu.memory_space<vmem>>, %arg15: memref<16x128xbf16, #tpu.memory_space<vmem>>, %arg16: memref<16x192xbf16, #tpu.memory_space<vmem>>) attributes {dimension_semantics = [#tpu.dimension_semantics<parallel>], iteration_bounds = array<i64: 1>, scalar_prefetch = 0 : i64, scratch_operands = 0 : i64, tpu.core_type = #tpu.core_type<tc>, window_params = [{transform_indices = @transform_0, window_bounds = array<i64: 16>}, {transform_indices = @transform_1, window_bounds = array<i64: 16, 32>}, {pipeline_mode = #tpu.pipeline_mode<synchronous>, transform_indices = @transform_2, window_bounds = array<i64: 2, 32>}, {pipeline_mode = #tpu.pipeline_mode<synchronous>, transform_indices = @transform_3, window_bounds = array<i64: 32, 64>}, {pipeline_mode = #tpu.pipeline_mode<synchronous>, transform_indices = @transform_4, window_bounds = array<i64: 1, 64>}, {pipeline_mode = #tpu.pipeline_mode<synchronous>, transform_indices = @transform_5, window_bounds = array<i64: 32, 64>}, {pipeline_mode = #tpu.pipeline_mode<synchronous>, transform_indices = @transform_6, window_bounds = array<i64: 1, 64>}, {pipeline_mode = #tpu.pipeline_mode<synchronous>, transform_indices = @transform_7, window_bounds = array<i64: 2, 32>}, {pipeline_mode = #tpu.pipeline_mode<synchronous>, transform_indices = @transform_8, window_bounds = array<i64: 32, 64>}, {pipeline_mode = #tpu.pipeline_mode<synchronous>, transform_indices = @transform_9, window_bounds = array<i64: 1, 64>}, {pipeline_mode = #tpu.pipeline_mode<synchronous>, transform_indices = @transform_10, window_bounds = array<i64: 64, 128>}, {pipeline_mode = #tpu.pipeline_mode<synchronous>, transform_indices = @transform_11, window_bounds = array<i64: 1, 128>}, {pipeline_mode = #tpu.pipeline_mode<synchronous>, transform_indices = @transform_12, window_bounds = array<i64: 64, 64>}, {pipeline_mode = #tpu.pipeline_mode<synchronous>, transform_indices = @transform_13, window_bounds = array<i64: 1, 64>}, {transform_indices = @transform_14, window_bounds = array<i64: 16, 128>}, {transform_indices = @transform_15, window_bounds = array<i64: 16, 192>}]} {
    %c0 = arith.constant 0 : index
    %c0_0 = arith.constant 0 : index
    %0 = vector.load %arg2[%c0, %c0_0] : memref<16x32xf32, #tpu.memory_space<vmem>>, vector<16x32xf32>
    %c0_1 = arith.constant 0 : index
    %c0_2 = arith.constant 0 : index
    %1 = vector.load %arg3[%c0_1, %c0_2] : memref<2x32xf32, #tpu.memory_space<vmem>>, vector<1x32xf32>
    %c1 = arith.constant 1 : index
    %c0_3 = arith.constant 0 : index
    %2 = vector.load %arg3[%c1, %c0_3] : memref<2x32xf32, #tpu.memory_space<vmem>>, vector<1x32xf32>
    %cst = arith.constant dense<0.000000e+00> : vector<16xf32>
    %3 = vector.multi_reduction <add>, %0, %cst [1] : vector<16x32xf32> to vector<16xf32>
    %4 = vector.shape_cast %3 : vector<16xf32> to vector<16x1xf32>
    %cst_4 = arith.constant 3.200000e+01 : f32
    %5 = vector.broadcast %cst_4 : f32 to vector<16x1xf32>
    %6 = arith.divf %4, %5 : vector<16x1xf32>
    %7 = vector.broadcast %6 : vector<16x1xf32> to vector<16x32xf32>
    %8 = arith.subf %0, %7 : vector<16x32xf32>
    %9 = arith.mulf %8, %8 : vector<16x32xf32>
    %cst_5 = arith.constant dense<0.000000e+00> : vector<16xf32>
    %10 = vector.multi_reduction <add>, %9, %cst_5 [1] : vector<16x32xf32> to vector<16xf32>
    %11 = vector.shape_cast %10 : vector<16xf32> to vector<16x1xf32>
    %cst_6 = arith.constant 3.200000e+01 : f32
    %12 = vector.broadcast %cst_6 : f32 to vector<16x1xf32>
    %13 = arith.divf %11, %12 : vector<16x1xf32>
    %14 = vector.broadcast %6 : vector<16x1xf32> to vector<16x32xf32>
    %15 = arith.subf %0, %14 : vector<16x32xf32>
    %cst_7 = arith.constant 9.99999974E-6 : f32
    %16 = vector.broadcast %cst_7 : f32 to vector<16x1xf32>
    %17 = arith.addf %13, %16 : vector<16x1xf32>
    %18 = math.rsqrt %17 : vector<16x1xf32>
    %19 = vector.broadcast %18 : vector<16x1xf32> to vector<16x32xf32>
    %20 = arith.mulf %15, %19 : vector<16x32xf32>
    %21 = vector.broadcast %1 : vector<1x32xf32> to vector<16x32xf32>
    %22 = arith.mulf %20, %21 : vector<16x32xf32>
    %23 = vector.broadcast %2 : vector<1x32xf32> to vector<16x32xf32>
    %24 = arith.addf %22, %23 : vector<16x32xf32>
    %c0_8 = arith.constant 0 : index
    %25 = memref.load %arg1[%c0_8] : memref<16xf32, #tpu.memory_space<smem>>
    %c1_9 = arith.constant 1 : index
    %26 = memref.load %arg1[%c1_9] : memref<16xf32, #tpu.memory_space<smem>>
    %c2 = arith.constant 2 : index
    %27 = memref.load %arg1[%c2] : memref<16xf32, #tpu.memory_space<smem>>
    %c3 = arith.constant 3 : index
    %28 = memref.load %arg1[%c3] : memref<16xf32, #tpu.memory_space<smem>>
    %c4 = arith.constant 4 : index
    %29 = memref.load %arg1[%c4] : memref<16xf32, #tpu.memory_space<smem>>
    %cst_10 = arith.constant 0.000000e+00 : f32
    %30 = vector.broadcast %cst_10 : f32 to vector<16x1xf32>
    %31 = vector.extract_strided_slice %24 {offsets = [0, 0], sizes = [16, 31], strides = [1, 1]} : vector<16x32xf32> to vector<16x31xf32>
    %32 = tpu.concatenate %30, %31 in 1 : vector<16x1xf32>, vector<16x31xf32> -> vector<16x32xf32>
    %33 = vector.extract_strided_slice %32 {offsets = [0, 0], sizes = [16, 31], strides = [1, 1]} : vector<16x32xf32> to vector<16x31xf32>
    %34 = tpu.concatenate %30, %33 in 1 : vector<16x1xf32>, vector<16x31xf32> -> vector<16x32xf32>
    %35 = vector.extract_strided_slice %34 {offsets = [0, 0], sizes = [16, 31], strides = [1, 1]} : vector<16x32xf32> to vector<16x31xf32>
    %36 = tpu.concatenate %30, %35 in 1 : vector<16x1xf32>, vector<16x31xf32> -> vector<16x32xf32>
    %37 = vector.broadcast %28 : f32 to vector<16x32xf32>
    %38 = arith.mulf %24, %37 : vector<16x32xf32>
    %39 = vector.broadcast %27 : f32 to vector<16x32xf32>
    %40 = arith.mulf %32, %39 : vector<16x32xf32>
    %41 = arith.addf %38, %40 : vector<16x32xf32>
    %42 = vector.broadcast %26 : f32 to vector<16x32xf32>
    %43 = arith.mulf %34, %42 : vector<16x32xf32>
    %44 = arith.addf %41, %43 : vector<16x32xf32>
    %45 = vector.broadcast %25 : f32 to vector<16x32xf32>
    %46 = arith.mulf %36, %45 : vector<16x32xf32>
    %47 = arith.addf %44, %46 : vector<16x32xf32>
    %48 = vector.broadcast %29 : f32 to vector<16x32xf32>
    %49 = arith.addf %47, %48 : vector<16x32xf32>
    %50 = arith.negf %49 : vector<16x32xf32>
    %51 = math.exp %50 : vector<16x32xf32>
    %cst_11 = arith.constant 1.000000e+00 : f32
    %52 = vector.broadcast %cst_11 : f32 to vector<16x32xf32>
    %53 = arith.addf %52, %51 : vector<16x32xf32>
    %54 = arith.divf %52, %53 : vector<16x32xf32>
    %55 = arith.mulf %49, %54 : vector<16x32xf32>
    %56 = arith.truncf %0 : vector<16x32xf32> to vector<16x32xbf16>
    %c0_12 = arith.constant 0 : index
    %c0_13 = arith.constant 0 : index
    %57 = vector.load %arg4[%c0_12, %c0_13] : memref<32x64xbf16, #tpu.memory_space<vmem>>, vector<32x64xbf16>
    %cst_14 = arith.constant dense<0.000000e+00> : vector<16x64xf32>
    %58 = tpu.matmul %56, %57, %cst_14 {dimension_numbers = #tpu.dot_dimension_numbers<[1], [0], [0], [1], [0, 0, 1, 1], [], []>} : vector<16x32xbf16>, vector<32x64xbf16>, vector<16x64xf32> -> vector<16x64xf32>
    %c0_15 = arith.constant 0 : index
    %c0_16 = arith.constant 0 : index
    %59 = vector.load %arg5[%c0_15, %c0_16] : memref<1x64xf32, #tpu.memory_space<vmem>>, vector<1x64xf32>
    %60 = vector.broadcast %59 : vector<1x64xf32> to vector<16x64xf32>
    %61 = arith.addf %58, %60 : vector<16x64xf32>
    %62 = arith.truncf %55 : vector<16x32xf32> to vector<16x32xbf16>
    %c0_17 = arith.constant 0 : index
    %c0_18 = arith.constant 0 : index
    %63 = vector.load %arg6[%c0_17, %c0_18] : memref<32x64xbf16, #tpu.memory_space<vmem>>, vector<32x64xbf16>
    %cst_19 = arith.constant dense<0.000000e+00> : vector<16x64xf32>
    %64 = tpu.matmul %62, %63, %cst_19 {dimension_numbers = #tpu.dot_dimension_numbers<[1], [0], [0], [1], [0, 0, 1, 1], [], []>} : vector<16x32xbf16>, vector<32x64xbf16>, vector<16x64xf32> -> vector<16x64xf32>
    %c0_20 = arith.constant 0 : index
    %c0_21 = arith.constant 0 : index
    %65 = vector.load %arg7[%c0_20, %c0_21] : memref<1x64xf32, #tpu.memory_space<vmem>>, vector<1x64xf32>
    %66 = vector.broadcast %65 : vector<1x64xf32> to vector<16x64xf32>
    %67 = arith.addf %64, %66 : vector<16x64xf32>
    %68 = tpu.concatenate %61, %67 in 1 : vector<16x64xf32>, vector<16x64xf32> -> vector<16x128xf32>
    %69 = arith.truncf %68 : vector<16x128xf32> to vector<16x128xbf16>
    %c0_22 = arith.constant 0 : index
    %c0_23 = arith.constant 0 : index
    %70 = vector.load %arg15[%c0_22, %c0_23] : memref<16x128xbf16, #tpu.memory_space<vmem>>, vector<16x128xbf16>
    tpu.vector_store %arg15[%c0_22, %c0_23], %69 {strides = array<i32>} : memref<16x128xbf16, #tpu.memory_space<vmem>>, vector<16x128xbf16>,
    %c0_24 = arith.constant 0 : index
    %c0_25 = arith.constant 0 : index
    %71 = vector.load %arg8[%c0_24, %c0_25] : memref<2x32xf32, #tpu.memory_space<vmem>>, vector<1x32xf32>
    %c1_26 = arith.constant 1 : index
    %c0_27 = arith.constant 0 : index
    %72 = vector.load %arg8[%c1_26, %c0_27] : memref<2x32xf32, #tpu.memory_space<vmem>>, vector<1x32xf32>
    %cst_28 = arith.constant dense<0.000000e+00> : vector<16xf32>
    %73 = vector.multi_reduction <add>, %0, %cst_28 [1] : vector<16x32xf32> to vector<16xf32>
    %74 = vector.shape_cast %73 : vector<16xf32> to vector<16x1xf32>
    %cst_29 = arith.constant 3.200000e+01 : f32
    %75 = vector.broadcast %cst_29 : f32 to vector<16x1xf32>
    %76 = arith.divf %74, %75 : vector<16x1xf32>
    %77 = vector.broadcast %76 : vector<16x1xf32> to vector<16x32xf32>
    %78 = arith.subf %0, %77 : vector<16x32xf32>
    %79 = arith.mulf %78, %78 : vector<16x32xf32>
    %cst_30 = arith.constant dense<0.000000e+00> : vector<16xf32>
    %80 = vector.multi_reduction <add>, %79, %cst_30 [1] : vector<16x32xf32> to vector<16xf32>
    %81 = vector.shape_cast %80 : vector<16xf32> to vector<16x1xf32>
    %cst_31 = arith.constant 3.200000e+01 : f32
    %82 = vector.broadcast %cst_31 : f32 to vector<16x1xf32>
    %83 = arith.divf %81, %82 : vector<16x1xf32>
    %84 = vector.broadcast %76 : vector<16x1xf32> to vector<16x32xf32>
    %85 = arith.subf %0, %84 : vector<16x32xf32>
    %cst_32 = arith.constant 9.99999974E-6 : f32
    %86 = vector.broadcast %cst_32 : f32 to vector<16x1xf32>
    %87 = arith.addf %83, %86 : vector<16x1xf32>
    %88 = math.rsqrt %87 : vector<16x1xf32>
    %89 = vector.broadcast %88 : vector<16x1xf32> to vector<16x32xf32>
    %90 = arith.mulf %85, %89 : vector<16x32xf32>
    %91 = vector.broadcast %71 : vector<1x32xf32> to vector<16x32xf32>
    %92 = arith.mulf %90, %91 : vector<16x32xf32>
    %93 = vector.broadcast %72 : vector<1x32xf32> to vector<16x32xf32>
    %94 = arith.addf %92, %93 : vector<16x32xf32>
    %95 = arith.truncf %94 : vector<16x32xf32> to vector<16x32xbf16>
    %c0_33 = arith.constant 0 : index
    %c0_34 = arith.constant 0 : index
    %96 = vector.load %arg9[%c0_33, %c0_34] : memref<32x64xbf16, #tpu.memory_space<vmem>>, vector<32x64xbf16>
    %cst_35 = arith.constant dense<0.000000e+00> : vector<16x64xf32>
    %97 = tpu.matmul %95, %96, %cst_35 {dimension_numbers = #tpu.dot_dimension_numbers<[1], [0], [0], [1], [0, 0, 1, 1], [], []>} : vector<16x32xbf16>, vector<32x64xbf16>, vector<16x64xf32> -> vector<16x64xf32>
    %c0_36 = arith.constant 0 : index
    %c0_37 = arith.constant 0 : index
    %98 = vector.load %arg10[%c0_36, %c0_37] : memref<1x64xf32, #tpu.memory_space<vmem>>, vector<1x64xf32>
    %99 = vector.broadcast %98 : vector<1x64xf32> to vector<16x64xf32>
    %100 = arith.addf %97, %99 : vector<16x64xf32>
    %c5 = arith.constant 5 : index
    %101 = memref.load %arg1[%c5] : memref<16xf32, #tpu.memory_space<smem>>
    %c6 = arith.constant 6 : index
    %102 = memref.load %arg1[%c6] : memref<16xf32, #tpu.memory_space<smem>>
    %c7 = arith.constant 7 : index
    %103 = memref.load %arg1[%c7] : memref<16xf32, #tpu.memory_space<smem>>
    %c8 = arith.constant 8 : index
    %104 = memref.load %arg1[%c8] : memref<16xf32, #tpu.memory_space<smem>>
    %c9 = arith.constant 9 : index
    %105 = memref.load %arg1[%c9] : memref<16xf32, #tpu.memory_space<smem>>
    %cst_38 = arith.constant 0.000000e+00 : f32
    %106 = vector.broadcast %cst_38 : f32 to vector<16x1xf32>
    %107 = vector.extract_strided_slice %100 {offsets = [0, 0], sizes = [16, 63], strides = [1, 1]} : vector<16x64xf32> to vector<16x63xf32>
    %108 = tpu.concatenate %106, %107 in 1 : vector<16x1xf32>, vector<16x63xf32> -> vector<16x64xf32>
    %109 = vector.extract_strided_slice %108 {offsets = [0, 0], sizes = [16, 63], strides = [1, 1]} : vector<16x64xf32> to vector<16x63xf32>
    %110 = tpu.concatenate %106, %109 in 1 : vector<16x1xf32>, vector<16x63xf32> -> vector<16x64xf32>
    %111 = vector.extract_strided_slice %110 {offsets = [0, 0], sizes = [16, 63], strides = [1, 1]} : vector<16x64xf32> to vector<16x63xf32>
    %112 = tpu.concatenate %106, %111 in 1 : vector<16x1xf32>, vector<16x63xf32> -> vector<16x64xf32>
    %113 = vector.broadcast %104 : f32 to vector<16x64xf32>
    %114 = arith.mulf %100, %113 : vector<16x64xf32>
    %115 = vector.broadcast %103 : f32 to vector<16x64xf32>
    %116 = arith.mulf %108, %115 : vector<16x64xf32>
    %117 = arith.addf %114, %116 : vector<16x64xf32>
    %118 = vector.broadcast %102 : f32 to vector<16x64xf32>
    %119 = arith.mulf %110, %118 : vector<16x64xf32>
    %120 = arith.addf %117, %119 : vector<16x64xf32>
    %121 = vector.broadcast %101 : f32 to vector<16x64xf32>
    %122 = arith.mulf %112, %121 : vector<16x64xf32>
    %123 = arith.addf %120, %122 : vector<16x64xf32>
    %124 = vector.broadcast %105 : f32 to vector<16x64xf32>
    %125 = arith.addf %123, %124 : vector<16x64xf32>
    %126 = arith.negf %125 : vector<16x64xf32>
    %127 = math.exp %126 : vector<16x64xf32>
    %cst_39 = arith.constant 1.000000e+00 : f32
    %128 = vector.broadcast %cst_39 : f32 to vector<16x64xf32>
    %129 = arith.addf %128, %127 : vector<16x64xf32>
    %130 = arith.divf %128, %129 : vector<16x64xf32>
    %131 = arith.mulf %125, %130 : vector<16x64xf32>
    %132 = arith.truncf %131 : vector<16x64xf32> to vector<16x64xbf16>
    %c0_40 = arith.constant 0 : index
    %c0_41 = arith.constant 0 : index
    %133 = vector.load %arg11[%c0_40, %c0_41] : memref<64x128xbf16, #tpu.memory_space<vmem>>, vector<64x128xbf16>
    %cst_42 = arith.constant dense<0.000000e+00> : vector<16x128xf32>
    %134 = tpu.matmul %132, %133, %cst_42 {dimension_numbers = #tpu.dot_dimension_numbers<[1], [0], [0], [1], [0, 0, 1, 1], [], []>} : vector<16x64xbf16>, vector<64x128xbf16>, vector<16x128xf32> -> vector<16x128xf32>
    %c0_43 = arith.constant 0 : index
    %c0_44 = arith.constant 0 : index
    %135 = vector.load %arg12[%c0_43, %c0_44] : memref<1x128xf32, #tpu.memory_space<vmem>>, vector<1x128xf32>
    %136 = vector.broadcast %135 : vector<1x128xf32> to vector<16x128xf32>
    %137 = arith.addf %134, %136 : vector<16x128xf32>
    %138 = arith.truncf %100 : vector<16x64xf32> to vector<16x64xbf16>
    %c0_45 = arith.constant 0 : index
    %c0_46 = arith.constant 0 : index
    %139 = vector.load %arg13[%c0_45, %c0_46] : memref<64x64xbf16, #tpu.memory_space<vmem>>, vector<64x64xbf16>
    %cst_47 = arith.constant dense<0.000000e+00> : vector<16x64xf32>
    %140 = tpu.matmul %138, %139, %cst_47 {dimension_numbers = #tpu.dot_dimension_numbers<[1], [0], [0], [1], [0, 0, 1, 1], [], []>} : vector<16x64xbf16>, vector<64x64xbf16>, vector<16x64xf32> -> vector<16x64xf32>
    %c0_48 = arith.constant 0 : index
    %c0_49 = arith.constant 0 : index
    %141 = vector.load %arg14[%c0_48, %c0_49] : memref<1x64xf32, #tpu.memory_space<vmem>>, vector<1x64xf32>
    %142 = vector.broadcast %141 : vector<1x64xf32> to vector<16x64xf32>
    %143 = arith.addf %140, %142 : vector<16x64xf32>
    %144 = vector.extract_strided_slice %143 {offsets = [0, 0], sizes = [16, 32], strides = [1, 1]} : vector<16x64xf32> to vector<16x32xf32>
    %145 = vector.extract_strided_slice %143 {offsets = [0, 32], sizes = [16, 32], strides = [1, 1]} : vector<16x64xf32> to vector<16x32xf32>
    %146 = arith.negf %145 : vector<16x32xf32>
    %147 = math.exp %146 : vector<16x32xf32>
    %cst_50 = arith.constant 1.000000e+00 : f32
    %148 = vector.broadcast %cst_50 : f32 to vector<16x32xf32>
    %149 = arith.addf %148, %147 : vector<16x32xf32>
    %150 = arith.divf %148, %149 : vector<16x32xf32>
    %151 = tpu.concatenate %137, %144, %150 in 1 : vector<16x128xf32>, vector<16x32xf32>, vector<16x32xf32> -> vector<16x192xf32>
    %152 = arith.truncf %151 : vector<16x192xf32> to vector<16x192xbf16>
    %c0_51 = arith.constant 0 : index
    %c0_52 = arith.constant 0 : index
    %153 = vector.load %arg16[%c0_51, %c0_52] : memref<16x192xbf16, #tpu.memory_space<vmem>>, vector<16x192xbf16>
    tpu.vector_store %arg16[%c0_51, %c0_52], %152 {strides = array<i32>} : memref<16x192xbf16, #tpu.memory_space<vmem>>, vector<16x192xbf16>,
    return
  }
  func.func @transform_0(%arg0: i32) -> i32 {
    %c0_i32 = arith.constant 0 : i32
    %c0_i32_0 = arith.constant 0 : i32
    return %c0_i32 : i32
  }
  func.func @transform_1(%arg0: i32) -> (i32, i32) {
    %c0_i32 = arith.constant 0 : i32
    %c0_i32_0 = arith.constant 0 : i32
    return %arg0, %c0_i32 : i32, i32
  }
  func.func @transform_2(%arg0: i32) -> (i32, i32) {
    %c0_i32 = arith.constant 0 : i32
    %c0_i32_0 = arith.constant 0 : i32
    %c0_i32_1 = arith.constant 0 : i32
    return %c0_i32, %c0_i32_0 : i32, i32
  }
  func.func @transform_3(%arg0: i32) -> (i32, i32) {
    %c0_i32 = arith.constant 0 : i32
    %c0_i32_0 = arith.constant 0 : i32
    %c0_i32_1 = arith.constant 0 : i32
    return %c0_i32, %c0_i32_0 : i32, i32
  }
  func.func @transform_4(%arg0: i32) -> (i32, i32) {
    %c0_i32 = arith.constant 0 : i32
    %c0_i32_0 = arith.constant 0 : i32
    %c0_i32_1 = arith.constant 0 : i32
    return %c0_i32, %c0_i32_0 : i32, i32
  }
  func.func @transform_5(%arg0: i32) -> (i32, i32) {
    %c0_i32 = arith.constant 0 : i32
    %c0_i32_0 = arith.constant 0 : i32
    %c0_i32_1 = arith.constant 0 : i32
    return %c0_i32, %c0_i32_0 : i32, i32
  }
  func.func @transform_6(%arg0: i32) -> (i32, i32) {
    %c0_i32 = arith.constant 0 : i32
    %c0_i32_0 = arith.constant 0 : i32
    %c0_i32_1 = arith.constant 0 : i32
    return %c0_i32, %c0_i32_0 : i32, i32
  }
  func.func @transform_7(%arg0: i32) -> (i32, i32) {
    %c0_i32 = arith.constant 0 : i32
    %c0_i32_0 = arith.constant 0 : i32
    %c0_i32_1 = arith.constant 0 : i32
    return %c0_i32, %c0_i32_0 : i32, i32
  }
  func.func @transform_8(%arg0: i32) -> (i32, i32) {
    %c0_i32 = arith.constant 0 : i32
    %c0_i32_0 = arith.constant 0 : i32
    %c0_i32_1 = arith.constant 0 : i32
    return %c0_i32, %c0_i32_0 : i32, i32
  }
  func.func @transform_9(%arg0: i32) -> (i32, i32) {
    %c0_i32 = arith.constant 0 : i32
    %c0_i32_0 = arith.constant 0 : i32
    %c0_i32_1 = arith.constant 0 : i32
    return %c0_i32, %c0_i32_0 : i32, i32
  }
  func.func @transform_10(%arg0: i32) -> (i32, i32) {
    %c0_i32 = arith.constant 0 : i32
    %c0_i32_0 = arith.constant 0 : i32
    %c0_i32_1 = arith.constant 0 : i32
    return %c0_i32, %c0_i32_0 : i32, i32
  }
  func.func @transform_11(%arg0: i32) -> (i32, i32) {
    %c0_i32 = arith.constant 0 : i32
    %c0_i32_0 = arith.constant 0 : i32
    %c0_i32_1 = arith.constant 0 : i32
    return %c0_i32, %c0_i32_0 : i32, i32
  }
  func.func @transform_12(%arg0: i32) -> (i32, i32) {
    %c0_i32 = arith.constant 0 : i32
    %c0_i32_0 = arith.constant 0 : i32
    %c0_i32_1 = arith.constant 0 : i32
    return %c0_i32, %c0_i32_0 : i32, i32
  }
  func.func @transform_13(%arg0: i32) -> (i32, i32) {
    %c0_i32 = arith.constant 0 : i32
    %c0_i32_0 = arith.constant 0 : i32
    %c0_i32_1 = arith.constant 0 : i32
    return %c0_i32, %c0_i32_0 : i32, i32
  }
  func.func @transform_14(%arg0: i32) -> (i32, i32) {
    %c0_i32 = arith.constant 0 : i32
    %c0_i32_0 = arith.constant 0 : i32
    return %arg0, %c0_i32 : i32, i32
  }
  func.func @transform_15(%arg0: i32) -> (i32, i32) {
    %c0_i32 = arith.constant 0 : i32
    %c0_i32_0 = arith.constant 0 : i32
    return %arg0, %c0_i32 : i32, i32
  }
}

</mosaic_0001>

<llo_original>
// kernel: tpu_custom_call.1
$region0: #{tpu_custom_call.1}
  #allocation0 [shape = 'u32[]', space=smem, size = 0x4, offset = 0x4, fixed_abs, tag = 'smem constant byte address 0x4 - core index']
  #allocation1 [shape = 'u32[144,128]{1,0:T(1,128)}', space=vmem, size = 0x12000, scoped, tag = 'internal scratch']
  %s0 = inlined_call_operand.hbm [shape: f32[16], index: 0, kind: input, shape index: {}]
  %s1 = inlined_call_operand.hbm [shape: f32[16,32], index: 1, kind: input, shape index: {}]
  %s2 = inlined_call_operand.vmem [shape: f32[2,32], index: 2, kind: input, shape index: {}]
  %s3 = inlined_call_operand.hbm [shape: bf16[32,64], index: 3, kind: input, shape index: {}]
  %s4 = inlined_call_operand.vmem [shape: f32[1,64], index: 4, kind: input, shape index: {}]
  %s5 = inlined_call_operand.hbm [shape: bf16[32,64], index: 5, kind: input, shape index: {}]
  %s6 = inlined_call_operand.vmem [shape: f32[1,64], index: 6, kind: input, shape index: {}]
  %s7 = inlined_call_operand.vmem [shape: f32[2,32], index: 7, kind: input, shape index: {}]
  %s8 = inlined_call_operand.hbm [shape: bf16[32,64], index: 8, kind: input, shape index: {}]
  %s9 = inlined_call_operand.vmem [shape: f32[1,64], index: 9, kind: input, shape index: {}]
  %s10 = inlined_call_operand.hbm [shape: bf16[64,128], index: 10, kind: input, shape index: {}]
  %s11 = inlined_call_operand.vmem [shape: f32[1,128], index: 11, kind: input, shape index: {}]
  %s12 = inlined_call_operand.hbm [shape: bf16[64,64], index: 12, kind: input, shape index: {}]
  %s13 = inlined_call_operand.vmem [shape: f32[1,64], index: 13, kind: input, shape index: {}]
  %s14 = inlined_call_operand.hbm [shape: bf16[16,128], index: 14, kind: output, shape index: {0}]
  %s15 = inlined_call_operand.hbm [shape: bf16[16,192], index: 15, kind: output, shape index: {1}]
  %16 = xla_tuple %s14, %s15
  %s17 = sld [smem:[#allocation0]]
  $region102: #{tpu_custom_call.1} parent=0
    _
  %s19 = ssub.s32 1, %s17
  %s20 = scalar_select 0, %s19, %s17
  $region1: #{tpu_custom_call.1} parent=0
    #allocation2 [shape = 'u8[512]{0}', space=smem, size = 0x200, scoped, tag = 'input window, operand 0, single buffered']
    #allocation3 [shape = 's32[1]{0}', space=sflag, size = 0x4, scoped, tag = 'scoped memory for tpu_custom_call.1']
    #allocation4 [shape = 's32[1]{0}', space=sflag, size = 0x4, scoped, tag = 'scoped memory for tpu_custom_call.1']
    #allocation5 [shape = 's32[1]{0}', space=sflag, size = 0x4, scoped, tag = 'scoped memory for tpu_custom_call.1']
    #allocation6 [shape = 'u8[8192]{0}', space=vmem, size = 0x2000, scoped, tag = 'input window, operand 1, single buffered']
    #allocation7 [shape = 'u8[8192]{0}', space=vmem, size = 0x2000, scoped, tag = 'input window, operand 3, single buffered']
    #allocation8 [shape = 's32[1]{0}', space=sflag, size = 0x4, scoped, tag = 'scoped memory for tpu_custom_call.1']
    #allocation9 [shape = 'u8[8192]{0}', space=vmem, size = 0x2000, scoped, tag = 'input window, operand 5, single buffered']
    #allocation10 [shape = 'u8[8192]{0}', space=vmem, size = 0x2000, scoped, tag = 'input window, operand 8, single buffered']
    #allocation11 [shape = 's32[1]{0}', space=sflag, size = 0x4, scoped, tag = 'scoped memory for tpu_custom_call.1']
    #allocation12 [shape = 'u8[16384]{0}', space=vmem, size = 0x4000, scoped, tag = 'input window, operand 10, single buffered']
    #allocation13 [shape = 'u8[16384]{0}', space=vmem, size = 0x4000, scoped, tag = 'input window, operand 12, single buffered']
    #allocation14 [shape = 's32[1]{0}', space=sflag, size = 0x4, scoped, tag = 'scoped memory for tpu_custom_call.1']
    #allocation15 [shape = 'u8[4096]{0}', space=vmem, size = 0x1000, scoped, tag = 'output window, operand 0, single buffered']
    #allocation16 [shape = 'u8[8192]{0}', space=vmem, size = 0x2000, scoped, tag = 'output window, operand 1, single buffered']
    #allocation17 [shape = 's32[1]{0}', space=sflag, size = 0x4, scoped, tag = 'scoped memory for tpu_custom_call.1']
    %21 = vsyncpa [#allocation5], 0
    %22 = vsyncpa [#allocation3], 0
    %23 = vsyncpa [#allocation8], 0
    %24 = vsyncpa [#allocation11], 0
    %25 = vsyncpa [#allocation14], 0
    %26 = vsyncpa [#allocation4], 0
    %27 = vsyncpa [#allocation17], 0
    // Predicated region
    $region2: #{tpu_custom_call.1} parent=1 // pred_check
      _
    $region3: #{tpu_custom_call.1} parent=1 // pred_check_branch
      %29 = sbr.rel (0) target = $region5
    $region4: #{tpu_custom_call.1} parent=1 // pred_region
      %s31 = ssub.s32 16, 16
      %32 = vsyncadd [#allocation5], %s31
      %35 = dma.hbm_to_smem %s0, 16, [#allocation2], [#allocation5]
    $region5: #{tpu_custom_call.1} parent=1 // pred_fallthru
      _
    // Predicated region
    $region6: #{tpu_custom_call.1} parent=1 // pred_check
      _
    $region7: #{tpu_custom_call.1} parent=1 // pred_check_branch
      %37 = sbr.rel (0) target = $region9
    $region8: #{tpu_custom_call.1} parent=1 // pred_region
      %s39 = ssub.s32 256, 256
      %40 = vsyncadd [#allocation3], %s39
      %s41 = sshll.u32 [#allocation6], 4
      %s42 = int_to_ptr.vmem [resolvable:$true] %s41
      %47 = dma.hbm_to_vmem [thread:$0]  %s1, 256, %s42, [#allocation3], 128, 128, 8
    $region9: #{tpu_custom_call.1} parent=1 // pred_fallthru
      _
    // Predicated region
    $region10: #{tpu_custom_call.1} parent=1 // pred_check
      _
    $region11: #{tpu_custom_call.1} parent=1 // pred_check_branch
      %49 = sbr.rel (0) target = $region13
    $region12: #{tpu_custom_call.1} parent=1 // pred_region
      _
    $region13: #{tpu_custom_call.1} parent=1 // pred_fallthru
      _
    // Predicated region
    $region14: #{tpu_custom_call.1} parent=1 // pred_check
      _
    $region15: #{tpu_custom_call.1} parent=1 // pred_check_branch
      %51 = sbr.rel (0) target = $region17
    $region16: #{tpu_custom_call.1} parent=1 // pred_region
      %s53 = ssub.s32 256, 256
      %54 = vsyncadd [#allocation8], %s53
      %s55 = sshll.u32 [#allocation7], 4
      %s56 = int_to_ptr.vmem [resolvable:$true] %s55
      %61 = dma.hbm_to_vmem [thread:$0]  %s3, 256, %s56, [#allocation8], 64, 64, 4
    $region17: #{tpu_custom_call.1} parent=1 // pred_fallthru
      _
    // Predicated region
    $region18: #{tpu_custom_call.1} parent=1 // pred_check
      _
    $region19: #{tpu_custom_call.1} parent=1 // pred_check_branch
      %63 = sbr.rel (0) target = $region21
    $region20: #{tpu_custom_call.1} parent=1 // pred_region
      _
    $region21: #{tpu_custom_call.1} parent=1 // pred_fallthru
      _
    // Predicated region
    $region22: #{tpu_custom_call.1} parent=1 // pred_check
      _
    $region23: #{tpu_custom_call.1} parent=1 // pred_check_branch
      %65 = sbr.rel (0) target = $region25
    $region24: #{tpu_custom_call.1} parent=1 // pred_region
      %s67 = ssub.s32 256, 256
      %68 = vsyncadd [#allocation8], %s67
      %s69 = sshll.u32 [#allocation9], 4
      %s70 = int_to_ptr.vmem [resolvable:$true] %s69
      %75 = dma.hbm_to_vmem [thread:$0]  %s5, 256, %s70, [#allocation8], 64, 64, 4
    $region25: #{tpu_custom_call.1} parent=1 // pred_fallthru
      _
    // Predicated region
    $region26: #{tpu_custom_call.1} parent=1 // pred_check
      _
    $region27: #{tpu_custom_call.1} parent=1 // pred_check_branch
      %77 = sbr.rel (0) target = $region29
    $region28: #{tpu_custom_call.1} parent=1 // pred_region
      _
    $region29: #{tpu_custom_call.1} parent=1 // pred_fallthru
      _
    // Predicated region
    $region30: #{tpu_custom_call.1} parent=1 // pred_check
      _
    $region31: #{tpu_custom_call.1} parent=1 // pred_check_branch
      %79 = sbr.rel (0) target = $region33
    $region32: #{tpu_custom_call.1} parent=1 // pred_region
      _
    $region33: #{tpu_custom_call.1} parent=1 // pred_fallthru
      _
    // Predicated region
    $region34: #{tpu_custom_call.1} parent=1 // pred_check
      _
    $region35: #{tpu_custom_call.1} parent=1 // pred_check_branch
      %81 = sbr.rel (0) target = $region37
    $region36: #{tpu_custom_call.1} parent=1 // pred_region
      %s83 = ssub.s32 256, 256
      %84 = vsyncadd [#allocation11], %s83
      %s85 = sshll.u32 [#allocation10], 4
      %s86 = int_to_ptr.vmem [resolvable:$true] %s85
      %91 = dma.hbm_to_vmem [thread:$0]  %s8, 256, %s86, [#allocation11], 64, 64, 4
    $region37: #{tpu_custom_call.1} parent=1 // pred_fallthru
      _
    // Predicated region
    $region38: #{tpu_custom_call.1} parent=1 // pred_check
      _
    $region39: #{tpu_custom_call.1} parent=1 // pred_check_branch
      %93 = sbr.rel (0) target = $region41
    $region40: #{tpu_custom_call.1} parent=1 // pred_region
      _
    $region41: #{tpu_custom_call.1} parent=1 // pred_fallthru
      _
    // Predicated region
    $region42: #{tpu_custom_call.1} parent=1 // pred_check
      _
    $region43: #{tpu_custom_call.1} parent=1 // pred_check_branch
      %95 = sbr.rel (0) target = $region45
    $region44: #{tpu_custom_call.1} parent=1 // pred_region
      %s97 = ssub.s32 512, 512
      %98 = vsyncadd [#allocation11], %s97
      %s99 = sshll.u32 [#allocation12], 4
      %s100 = int_to_ptr.vmem [resolvable:$true] %s99
      %105 = dma.hbm_to_vmem [thread:$0]  %s10, 512, %s100, [#allocation11], 64, 64, 4
    $region45: #{tpu_custom_call.1} parent=1 // pred_fallthru
      _
    // Predicated region
    $region46: #{tpu_custom_call.1} parent=1 // pred_check
      _
    $region47: #{tpu_custom_call.1} parent=1 // pred_check_branch
      %107 = sbr.rel (0) target = $region49
    $region48: #{tpu_custom_call.1} parent=1 // pred_region
      _
    $region49: #{tpu_custom_call.1} parent=1 // pred_fallthru
      _
    // Predicated region
    $region50: #{tpu_custom_call.1} parent=1 // pred_check
      _
    $region51: #{tpu_custom_call.1} parent=1 // pred_check_branch
      %109 = sbr.rel (0) target = $region53
    $region52: #{tpu_custom_call.1} parent=1 // pred_region
      %s111 = ssub.s32 512, 512
      %112 = vsyncadd [#allocation14], %s111
      %s113 = sshll.u32 [#allocation13], 4
      %s114 = int_to_ptr.vmem [resolvable:$true] %s113
      %119 = dma.hbm_to_vmem [thread:$0]  %s12, 512, %s114, [#allocation14], 64, 64, 4
    $region53: #{tpu_custom_call.1} parent=1 // pred_fallthru
      _
    // Predicated region
    $region54: #{tpu_custom_call.1} parent=1 // pred_check
      _
    $region55: #{tpu_custom_call.1} parent=1 // pred_check_branch
      %121 = sbr.rel (0) target = $region57
    $region56: #{tpu_custom_call.1} parent=1 // pred_region
      _
    $region57: #{tpu_custom_call.1} parent=1 // pred_fallthru
      _
    // Predicated region
    $region58: #{tpu_custom_call.1} parent=1 // pred_check
      _
    $region59: #{tpu_custom_call.1} parent=1 // pred_check_branch
      %123 = sbr.rel (0) target = $region61
    $region60: #{tpu_custom_call.1} parent=1 // pred_region
      %124 = dma.done [#allocation5], 16
    $region61: #{tpu_custom_call.1} parent=1 // pred_fallthru
      _
    // Predicated region
    $region62: #{tpu_custom_call.1} parent=1 // pred_check
      _
    $region63: #{tpu_custom_call.1} parent=1 // pred_check_branch
      %126 = sbr.rel (0) target = $region65
    $region64: #{tpu_custom_call.1} parent=1 // pred_region
      %127 = dma.done [#allocation3], 256
    $region65: #{tpu_custom_call.1} parent=1 // pred_fallthru
      _
    // Predicated region
    $region66: #{tpu_custom_call.1} parent=1 // pred_check
      _
    $region67: #{tpu_custom_call.1} parent=1 // pred_check_branch
      %129 = sbr.rel (0) target = $region69
    $region68: #{tpu_custom_call.1} parent=1 // pred_region
      %130 = dma.done [#allocation8], 256
    $region69: #{tpu_custom_call.1} parent=1 // pred_fallthru
      _
    // Predicated region
    $region70: #{tpu_custom_call.1} parent=1 // pred_check
      _
    $region71: #{tpu_custom_call.1} parent=1 // pred_check_branch
      %132 = sbr.rel (0) target = $region73
    $region72: #{tpu_custom_call.1} parent=1 // pred_region
      %133 = dma.done [#allocation8], 256
    $region73: #{tpu_custom_call.1} parent=1 // pred_fallthru
      _
    // Predicated region
    $region74: #{tpu_custom_call.1} parent=1 // pred_check
      _
    $region75: #{tpu_custom_call.1} parent=1 // pred_check_branch
      %135 = sbr.rel (0) target = $region77
    $region76: #{tpu_custom_call.1} parent=1 // pred_region
      %136 = dma.done [#allocation11], 256
    $region77: #{tpu_custom_call.1} parent=1 // pred_fallthru
      _
    // Predicated region
    $region78: #{tpu_custom_call.1} parent=1 // pred_check
      _
    $region79: #{tpu_custom_call.1} parent=1 // pred_check_branch
      %138 = sbr.rel (0) target = $region81
    $region80: #{tpu_custom_call.1} parent=1 // pred_region
      %139 = dma.done [#allocation11], 512
    $region81: #{tpu_custom_call.1} parent=1 // pred_fallthru
      _
    // Predicated region
    $region82: #{tpu_custom_call.1} parent=1 // pred_check
      _
    $region83: #{tpu_custom_call.1} parent=1 // pred_check_branch
      %141 = sbr.rel (0) target = $region85
    $region84: #{tpu_custom_call.1} parent=1 // pred_region
      %142 = dma.done [#allocation14], 512
    $region85: #{tpu_custom_call.1} parent=1 // pred_fallthru
      _
    %143 = sfence
    %v145 = vld [vmem:[#allocation6] sm:$0xff]
    %v146 = vld [vmem:[#allocation6 + $0x8] sm:$0xff]
    %v147 = vld [vmem:[%s2] sm:$0x1]
    %v148 = vld [vmem:[%s2 + $0x1] sm:$0x1]
    %vm149 = vcmask 261120
    %v150 = vsel %vm149, %v145, 0.0
    %151 = vadd.xlane.f32.xlu0 %v150
    %v152 = vpop.xlane.xlu0 %151
    %v153 = vsel %vm149, %v146, 0.0
    %154 = vadd.xlane.f32.xlu0 %v153
    %v155 = vpop.xlane.xlu0 %154
    %v156 = vrcp.pop 32.0
    %v157 = vmul.f32 %v152, %v156
    %v158 = vmul.f32 %v155, %v156
    %v159 = vsub.f32 %v145, %v157
    %v160 = vsub.f32 %v146, %v158
    %v161 = vmul.f32 %v159, %v159
    %v162 = vmul.f32 %v160, %v160
    %v163 = vsel %vm149, %v161, 0.0
    %164 = vadd.xlane.f32.xlu0 %v163
    %v165 = vpop.xlane.xlu0 %164
    %v166 = vsel %vm149, %v162, 0.0
    %167 = vadd.xlane.f32.xlu0 %v166
    %v168 = vpop.xlane.xlu0 %167
    %v169 = vmul.f32 %v165, %v156
    %v170 = vmul.f32 %v168, %v156
    %v171 = vadd.f32 %v169, 1e-05
    %v172 = vadd.f32 %v170, 1e-05
    %v173 = vrsqrt.pop %v171
    %v174 = vrsqrt.pop %v172
    %v175 = vmul.f32 %v159, %v173
    %v176 = vmul.f32 %v160, %v174
    %v177 = vlaneseq
    %v178 = vshrl.u32 %v177, 7
    %v179 = vsub.s32 0, %v178
    %v180 = vrot.slane %v147, %v179
    %v181 = vmul.f32 %v175, %v180
    %v182 = vmul.f32 %v176, %v180
    %v183 = vlaneseq
    %v184 = vshrl.u32 %v183, 7
    %v185 = vsub.s32 0, %v184
    %v186 = vrot.slane %v148, %v185
    %v187 = vadd.f32 %v181, %v186
    %v188 = vadd.f32 %v182, %v186
    %s189 = sld [smem:[#allocation2]]
    %s190 = sld [smem:[#allocation2 + $0x1]]
    %s191 = sld [smem:[#allocation2 + $0x2]]
    %s192 = sld [smem:[#allocation2 + $0x3]]
    %s193 = sld [smem:[#allocation2 + $0x4]]
    %196 = vrot.lane.b32.xlu0 %v187, 1
    %v197 = vpop.permute.xlu0 %196
    %198 = vrot.lane.b32.xlu0 %v188, 1
    %v199 = vpop.permute.xlu0 %198
    %vm202 = vcmask 7168
    %v203 = vsel %vm202, 0.0, %v197
    %v204 = vsel %vm202, 0.0, %v199
    %207 = vrot.lane.b32.xlu0 %v203, 1
    %v208 = vpop.permute.xlu0 %207
    %209 = vrot.lane.b32.xlu0 %v204, 1
    %v210 = vpop.permute.xlu0 %209
    %v213 = vsel %vm202, 0.0, %v208
    %v214 = vsel %vm202, 0.0, %v210
    %217 = vrot.lane.b32.xlu0 %v213, 1
    %v218 = vpop.permute.xlu0 %217
    %219 = vrot.lane.b32.xlu0 %v214, 1
    %v220 = vpop.permute.xlu0 %219
    %v223 = vsel %vm202, 0.0, %v218
    %v224 = vsel %vm202, 0.0, %v220
    %v225 = vstv %s192
    %v226 = vmul.f32 %v187, %v225
    %v227 = vmul.f32 %v188, %v225
    %v228 = vstv %s191
    %v229 = vmul.f32 %v203, %v228
    %v230 = vmul.f32 %v204, %v228
    %v231 = vadd.f32 %v226, %v229
    %v232 = vadd.f32 %v227, %v230
    %v233 = vstv %s190
    %v234 = vmul.f32 %v213, %v233
    %v235 = vmul.f32 %v214, %v233
    %v236 = vadd.f32 %v231, %v234
    %v237 = vadd.f32 %v232, %v235
    %v238 = vstv %s189
    %v239 = vmul.f32 %v223, %v238
    %v240 = vmul.f32 %v224, %v238
    %v241 = vadd.f32 %v236, %v239
    %v242 = vadd.f32 %v237, %v240
    %v243 = vstv %s193
    %v244 = vadd.f32 %v241, %v243
    %v245 = vadd.f32 %v242, %v243
    %v246 = vxor.u32 %v244, 2147483648
    %v247 = vxor.u32 %v245, 2147483648
    %v248 = vmul.f32 %v246, 1.442695
    %v249 = vpow.pop %v248
    %v250 = vmul.f32 %v247, 1.442695
    %v251 = vpow.pop %v250
    %v252 = vadd.f32 %v249, 1.0
    %v253 = vadd.f32 %v251, 1.0
    %v254 = vrcp.pop %v252
    %v255 = vmul.f32 1.0, %v254
    %v256 = vrcp.pop %v253
    %v257 = vmul.f32 1.0, %v256
    %v258 = vmul.f32 %v244, %v255
    %v259 = vmul.f32 %v245, %v257
    %v260 = vpack.c.bf16 %v146, %v145
    %v261 = vld [vmem:[#allocation7] sm:$0xf]
    %v262 = vld [vmem:[#allocation7 + $0x4] sm:$0xf]
    %v263 = vld [vmem:[#allocation7 + $0x8] sm:$0xf]
    %v264 = vld [vmem:[#allocation7 + $0xc] sm:$0xf]
    %v265 = vld [vmem:[%s4] sm:$0x1]
    %v267 = vlaneseq
    %v268 = vshrl.u32 %v267, 7
    %v269 = vsub.s32 0, %v268
    %v270 = vrot.slane %v265, %v269
    %v276 = vunpack.c.l.b16 %v261
    %v277 = vunpack.c.l.b16 %v262
    %v278 = vunpack.c.l.b16 %v263
    %v279 = vunpack.c.l.b16 %v264
    %v280 = vpack.c.b16 %v277, %v276
    %v281 = vpack.c.b16 %v279, %v278
    %v285 = vsel %vm149, %v260, 0
    %287 = vmatprep.subr.bf16.mxu0 0
    %288 = vmatpush1.bf16.msra.mxu0 0
    %289 = vmatprep.subr.bf16.mxu0 0
    %290 = vmatpush1.bf16.msra.mxu0 0
    %291 = vmatprep.subr.bf16.mxu0 0
    %292 = vmatpush1.bf16.msra.mxu0 0
    %293 = vmatprep.subr.bf16.mxu0 0
    %294 = vmatpush1.bf16.msra.mxu0 0
    %295 = vmatprep.subr.bf16.mxu0 0
    %296 = vmatpush1.bf16.msra.mxu0 0
    %297 = vmatprep.subr.bf16.mxu0 0
    %298 = vmatpush1.bf16.msra.mxu0 0
    %299 = vmatprep.subr.bf16.mxu0 0
    %300 = vmatpush1.bf16.msra.mxu0 %v281
    %301 = vmatprep.subr.bf16.mxu0 0
    %302 = vmatpush1.bf16.msra.mxu0 %v280
    %303 = vmatprep.subr.bf16.mxu0 0
    %304 = vmatpush2.bf16.msra.mxu0 0
    %305 = vmatprep.subr.bf16.mxu0 0
    %306 = vmatpush2.bf16.msra.mxu0 0
    %307 = vmatprep.subr.bf16.mxu0 0
    %308 = vmatpush2.bf16.msra.mxu0 0
    %309 = vmatprep.subr.bf16.mxu0 0
    %310 = vmatpush2.bf16.msra.mxu0 0
    %311 = vmatprep.subr.bf16.mxu0 0
    %312 = vmatpush2.bf16.msra.mxu0 0
    %313 = vmatprep.subr.bf16.mxu0 0
    %314 = vmatpush2.bf16.msra.mxu0 0
    %315 = vmatprep.subr.bf16.mxu0 0
    %316 = vmatpush2.bf16.msra.mxu0 0
    %317 = vmatprep.subr.bf16.mxu0 0
    %318 = vmatpush2.bf16.msra.mxu0 0
    %319 = vmatprep.mubr.bf16.mxu0 0
    %320 = vmatmul.mubr.bf16.gmra.mxu0 %v285
    %v321 = vpop.f32.mrf.mxu0
    %v322 = vadd.f32 %v270, %v321
    %v323 = vpop.f32.mrf.mxu0
    %v324 = vpop.f32.mrf.mxu0
    %v325 = vadd.f32 %v270, %v324
    %v326 = vpop.f32.mrf.mxu0
    %327 = vdwg.mxu0
    %v328 = vpack.c.bf16 %v259, %v258
    %v329 = vld [vmem:[#allocation9] sm:$0xf]
    %v330 = vld [vmem:[#allocation9 + $0x4] sm:$0xf]
    %v331 = vld [vmem:[#allocation9 + $0x8] sm:$0xf]
    %v332 = vld [vmem:[#allocation9 + $0xc] sm:$0xf]
    %v333 = vld [vmem:[%s6] sm:$0x1]
    %v335 = vlaneseq
    %v336 = vshrl.u32 %v335, 7
    %v337 = vsub.s32 0, %v336
    %v338 = vrot.slane %v333, %v337
    %v344 = vunpack.c.l.b16 %v329
    %v345 = vunpack.c.l.b16 %v330
    %v346 = vunpack.c.l.b16 %v331
    %v347 = vunpack.c.l.b16 %v332
    %v348 = vpack.c.b16 %v345, %v344
    %v349 = vpack.c.b16 %v347, %v346
    %v353 = vsel %vm149, %v328, 0
    %355 = vmatprep.subr.bf16.mxu0 0
    %356 = vmatpush1.bf16.msra.mxu0 0
    %357 = vmatprep.subr.bf16.mxu0 0
    %358 = vmatpush1.bf16.msra.mxu0 0
    %359 = vmatprep.subr.bf16.mxu0 0
    %360 = vmatpush1.bf16.msra.mxu0 0
    %361 = vmatprep.subr.bf16.mxu0 0
    %362 = vmatpush1.bf16.msra.mxu0 0
    %363 = vmatprep.subr.bf16.mxu0 0
    %364 = vmatpush1.bf16.msra.mxu0 0
    %365 = vmatprep.subr.bf16.mxu0 0
    %366 = vmatpush1.bf16.msra.mxu0 0
    %367 = vmatprep.subr.bf16.mxu0 0
    %368 = vmatpush1.bf16.msra.mxu0 %v349
    %369 = vmatprep.subr.bf16.mxu0 0
    %370 = vmatpush1.bf16.msra.mxu0 %v348
    %371 = vmatprep.subr.bf16.mxu0 0
    %372 = vmatpush2.bf16.msra.mxu0 0
    %373 = vmatprep.subr.bf16.mxu0 0
    %374 = vmatpush2.bf16.msra.mxu0 0
    %375 = vmatprep.subr.bf16.mxu0 0
    %376 = vmatpush2.bf16.msra.mxu0 0
    %377 = vmatprep.subr.bf16.mxu0 0
    %378 = vmatpush2.bf16.msra.mxu0 0
    %379 = vmatprep.subr.bf16.mxu0 0
    %380 = vmatpush2.bf16.msra.mxu0 0
    %381 = vmatprep.subr.bf16.mxu0 0
    %382 = vmatpush2.bf16.msra.mxu0 0
    %383 = vmatprep.subr.bf16.mxu0 0
    %384 = vmatpush2.bf16.msra.mxu0 0
    %385 = vmatprep.subr.bf16.mxu0 0
    %386 = vmatpush2.bf16.msra.mxu0 0
    %387 = vmatprep.mubr.bf16.mxu0 0
    %388 = vmatmul.mubr.bf16.gmra.mxu0 %v353
    %v389 = vpop.f32.mrf.mxu0
    %v390 = vadd.f32 %v338, %v389
    %v391 = vpop.f32.mrf.mxu0
    %v392 = vpop.f32.mrf.mxu0
    %v393 = vadd.f32 %v338, %v392
    %v394 = vpop.f32.mrf.mxu0
    %395 = vdwg.mxu0
    %398 = vrot.lane.b32.xlu0 %v390, 64
    %v399 = vpop.permute.xlu0 %398
    %400 = vrot.lane.b32.xlu0 %v393, 64
    %v401 = vpop.permute.xlu0 %400
    %vm404 = vcmask 523264
    %v405 = vsel %vm404, %v322, %v399
    %v406 = vsel %vm404, %v325, %v401
    %v407 = vpack.c.bf16 %v406, %v405
    %v409 = vunpack.c.l.b16 %v407
    %v410 = vunpack.c.h.b16 %v407
    %v411 = vpack.c.b16 %v409, %v409
    %v412 = vpack.c.b16 %v410, %v410
    %415 = vst [vmem:[#allocation15] sm:$0xf] %v411
    %416 = vst [vmem:[#allocation15 + $0x4] sm:$0xf] %v412
    %v417 = vld [vmem:[%s7] sm:$0x1]
    %v418 = vld [vmem:[%s7 + $0x1] sm:$0x1]
    %v419 = vlaneseq
    %v420 = vshrl.u32 %v419, 7
    %v421 = vsub.s32 0, %v420
    %v422 = vrot.slane %v417, %v421
    %v423 = vmul.f32 %v175, %v422
    %v424 = vmul.f32 %v176, %v422
    %v425 = vlaneseq
    %v426 = vshrl.u32 %v425, 7
    %v427 = vsub.s32 0, %v426
    %v428 = vrot.slane %v418, %v427
    %v429 = vadd.f32 %v423, %v428
    %v430 = vadd.f32 %v424, %v428
    %v431 = vpack.c.bf16 %v430, %v429
    %v432 = vld [vmem:[#allocation10] sm:$0xf]
    %v433 = vld [vmem:[#allocation10 + $0x4] sm:$0xf]
    %v434 = vld [vmem:[#allocation10 + $0x8] sm:$0xf]
    %v435 = vld [vmem:[#allocation10 + $0xc] sm:$0xf]
    %v436 = vld [vmem:[%s9] sm:$0x1]
    %v438 = vlaneseq
    %v439 = vshrl.u32 %v438, 7
    %v440 = vsub.s32 0, %v439
    %v441 = vrot.slane %v436, %v440
    %v447 = vunpack.c.l.b16 %v432
    %v448 = vunpack.c.l.b16 %v433
    %v449 = vunpack.c.l.b16 %v434
    %v450 = vunpack.c.l.b16 %v435
    %v451 = vpack.c.b16 %v448, %v447
    %v452 = vpack.c.b16 %v450, %v449
    %v456 = vsel %vm149, %v431, 0
    %458 = vmatprep.subr.bf16.mxu0 0
    %459 = vmatpush1.bf16.msra.mxu0 0
    %460 = vmatprep.subr.bf16.mxu0 0
    %461 = vmatpush1.bf16.msra.mxu0 0
    %462 = vmatprep.subr.bf16.mxu0 0
    %463 = vmatpush1.bf16.msra.mxu0 0
    %464 = vmatprep.subr.bf16.mxu0 0
    %465 = vmatpush1.bf16.msra.mxu0 0
    %466 = vmatprep.subr.bf16.mxu0 0
    %467 = vmatpush1.bf16.msra.mxu0 0
    %468 = vmatprep.subr.bf16.mxu0 0
    %469 = vmatpush1.bf16.msra.mxu0 0
    %470 = vmatprep.subr.bf16.mxu0 0
    %471 = vmatpush1.bf16.msra.mxu0 %v452
    %472 = vmatprep.subr.bf16.mxu0 0
    %473 = vmatpush1.bf16.msra.mxu0 %v451
    %474 = vmatprep.subr.bf16.mxu0 0
    %475 = vmatpush2.bf16.msra.mxu0 0
    %476 = vmatprep.subr.bf16.mxu0 0
    %477 = vmatpush2.bf16.msra.mxu0 0
    %478 = vmatprep.subr.bf16.mxu0 0
    %479 = vmatpush2.bf16.msra.mxu0 0
    %480 = vmatprep.subr.bf16.mxu0 0
    %481 = vmatpush2.bf16.msra.mxu0 0
    %482 = vmatprep.subr.bf16.mxu0 0
    %483 = vmatpush2.bf16.msra.mxu0 0
    %484 = vmatprep.subr.bf16.mxu0 0
    %485 = vmatpush2.bf16.msra.mxu0 0
    %486 = vmatprep.subr.bf16.mxu0 0
    %487 = vmatpush2.bf16.msra.mxu0 0
    %488 = vmatprep.subr.bf16.mxu0 0
    %489 = vmatpush2.bf16.msra.mxu0 0
    %490 = vmatprep.mubr.bf16.mxu0 0
    %491 = vmatmul.mubr.bf16.gmra.mxu0 %v456
    %v492 = vpop.f32.mrf.mxu0
    %v493 = vadd.f32 %v441, %v492
    %v494 = vpop.f32.mrf.mxu0
    %v495 = vpop.f32.mrf.mxu0
    %v496 = vadd.f32 %v441, %v495
    %v497 = vpop.f32.mrf.mxu0
    %498 = vdwg.mxu0
    %s499 = sld [smem:[#allocation2 + $0x5]]
    %s500 = sld [smem:[#allocation2 + $0x6]]
    %s501 = sld [smem:[#allocation2 + $0x7]]
    %s502 = sld [smem:[#allocation2 + $0x8]]
    %s503 = sld [smem:[#allocation2 + $0x9]]
    %506 = vrot.lane.b32.xlu0 %v493, 1
    %v507 = vpop.permute.xlu0 %506
    %508 = vrot.lane.b32.xlu0 %v496, 1
    %v509 = vpop.permute.xlu0 %508
    %v512 = vsel %vm202, 0.0, %v507
    %v513 = vsel %vm202, 0.0, %v509
    %516 = vrot.lane.b32.xlu0 %v512, 1
    %v517 = vpop.permute.xlu0 %516
    %518 = vrot.lane.b32.xlu0 %v513, 1
    %v519 = vpop.permute.xlu0 %518
    %v522 = vsel %vm202, 0.0, %v517
    %v523 = vsel %vm202, 0.0, %v519
    %526 = vrot.lane.b32.xlu0 %v522, 1
    %v527 = vpop.permute.xlu0 %526
    %528 = vrot.lane.b32.xlu0 %v523, 1
    %v529 = vpop.permute.xlu0 %528
    %v532 = vsel %vm202, 0.0, %v527
    %v533 = vsel %vm202, 0.0, %v529
    %v534 = vstv %s502
    %v535 = vmul.f32 %v493, %v534
    %v536 = vmul.f32 %v496, %v534
    %v537 = vstv %s501
    %v538 = vmul.f32 %v512, %v537
    %v539 = vmul.f32 %v513, %v537
    %v540 = vadd.f32 %v535, %v538
    %v541 = vadd.f32 %v536, %v539
    %v542 = vstv %s500
    %v543 = vmul.f32 %v522, %v542
    %v544 = vmul.f32 %v523, %v542
    %v545 = vadd.f32 %v540, %v543
    %v546 = vadd.f32 %v541, %v544
    %v547 = vstv %s499
    %v548 = vmul.f32 %v532, %v547
    %v549 = vmul.f32 %v533, %v547
    %v550 = vadd.f32 %v545, %v548
    %v551 = vadd.f32 %v546, %v549
    %v552 = vstv %s503
    %v553 = vadd.f32 %v550, %v552
    %v554 = vadd.f32 %v551, %v552
    %v555 = vxor.u32 %v553, 2147483648
    %v556 = vxor.u32 %v554, 2147483648
    %v557 = vmul.f32 %v555, 1.442695
    %v558 = vpow.pop %v557
    %v559 = vmul.f32 %v556, 1.442695
    %v560 = vpow.pop %v559
    %v561 = vadd.f32 %v558, 1.0
    %v562 = vadd.f32 %v560, 1.0
    %v563 = vrcp.pop %v561
    %v564 = vmul.f32 1.0, %v563
    %v565 = vrcp.pop %v562
    %v566 = vmul.f32 1.0, %v565
    %v567 = vmul.f32 %v553, %v564
    %v568 = vmul.f32 %v554, %v566
    %v569 = vpack.c.bf16 %v568, %v567
    %v570 = vld [vmem:[#allocation12] sm:$0xf]
    %v571 = vld [vmem:[#allocation12 + $0x4] sm:$0xf]
    %v572 = vld [vmem:[#allocation12 + $0x8] sm:$0xf]
    %v573 = vld [vmem:[#allocation12 + $0xc] sm:$0xf]
    %v574 = vld [vmem:[#allocation12 + $0x10] sm:$0xf]
    %v575 = vld [vmem:[#allocation12 + $0x14] sm:$0xf]
    %v576 = vld [vmem:[#allocation12 + $0x18] sm:$0xf]
    %v577 = vld [vmem:[#allocation12 + $0x1c] sm:$0xf]
    %v578 = vld [vmem:[%s11] sm:$0x1]
    %v580 = vlaneseq
    %v581 = vshrl.u32 %v580, 7
    %v582 = vsub.s32 0, %v581
    %v583 = vrot.slane %v578, %v582
    %v593 = vunpack.c.l.b16 %v570
    %v594 = vunpack.c.l.b16 %v571
    %v595 = vunpack.c.l.b16 %v572
    %v596 = vunpack.c.l.b16 %v573
    %v597 = vunpack.c.l.b16 %v574
    %v598 = vunpack.c.l.b16 %v575
    %v599 = vunpack.c.l.b16 %v576
    %v600 = vunpack.c.l.b16 %v577
    %v601 = vpack.c.b16 %v594, %v593
    %v602 = vpack.c.b16 %v596, %v595
    %v603 = vpack.c.b16 %v598, %v597
    %v604 = vpack.c.b16 %v600, %v599
    %v610 = vsel %vm404, %v569, 0
    %612 = vmatprep.subr.bf16.mxu0 0
    %613 = vmatpush1.bf16.msra.mxu0 0
    %614 = vmatprep.subr.bf16.mxu0 0
    %615 = vmatpush1.bf16.msra.mxu0 0
    %616 = vmatprep.subr.bf16.mxu0 0
    %617 = vmatpush1.bf16.msra.mxu0 0
    %618 = vmatprep.subr.bf16.mxu0 0
    %619 = vmatpush1.bf16.msra.mxu0 0
    %620 = vmatprep.subr.bf16.mxu0 0
    %621 = vmatpush1.bf16.msra.mxu0 %v604
    %622 = vmatprep.subr.bf16.mxu0 0
    %623 = vmatpush1.bf16.msra.mxu0 %v603
    %624 = vmatprep.subr.bf16.mxu0 0
    %625 = vmatpush1.bf16.msra.mxu0 %v602
    %626 = vmatprep.subr.bf16.mxu0 0
    %627 = vmatpush1.bf16.msra.mxu0 %v601
    %628 = vmatprep.subr.bf16.mxu0 0
    %629 = vmatpush2.bf16.msra.mxu0 0
    %630 = vmatprep.subr.bf16.mxu0 0
    %631 = vmatpush2.bf16.msra.mxu0 0
    %632 = vmatprep.subr.bf16.mxu0 0
    %633 = vmatpush2.bf16.msra.mxu0 0
    %634 = vmatprep.subr.bf16.mxu0 0
    %635 = vmatpush2.bf16.msra.mxu0 0
    %636 = vmatprep.subr.bf16.mxu0 0
    %637 = vmatpush2.bf16.msra.mxu0 0
    %638 = vmatprep.subr.bf16.mxu0 0
    %639 = vmatpush2.bf16.msra.mxu0 0
    %640 = vmatprep.subr.bf16.mxu0 0
    %641 = vmatpush2.bf16.msra.mxu0 0
    %642 = vmatprep.subr.bf16.mxu0 0
    %643 = vmatpush2.bf16.msra.mxu0 0
    %644 = vmatprep.mubr.bf16.mxu0 0
    %645 = vmatmul.mubr.bf16.gmra.mxu0 %v610
    %v646 = vpop.f32.mrf.mxu0
    %v647 = vadd.f32 %v583, %v646
    %v648 = vpop.f32.mrf.mxu0
    %v649 = vpop.f32.mrf.mxu0
    %v650 = vadd.f32 %v583, %v649
    %v651 = vpop.f32.mrf.mxu0
    %652 = vdwg.mxu0
    %v653 = vpack.c.bf16 %v496, %v493
    %v654 = vld [vmem:[#allocation13] sm:$0xf]
    %v655 = vld [vmem:[#allocation13 + $0x4] sm:$0xf]
    %v656 = vld [vmem:[#allocation13 + $0x8] sm:$0xf]
    %v657 = vld [vmem:[#allocation13 + $0xc] sm:$0xf]
    %v658 = vld [vmem:[#allocation13 + $0x10] sm:$0xf]
    %v659 = vld [vmem:[#allocation13 + $0x14] sm:$0xf]
    %v660 = vld [vmem:[#allocation13 + $0x18] sm:$0xf]
    %v661 = vld [vmem:[#allocation13 + $0x1c] sm:$0xf]
    %v662 = vld [vmem:[%s13] sm:$0x1]
    %v664 = vlaneseq
    %v665 = vshrl.u32 %v664, 7
    %v666 = vsub.s32 0, %v665
    %v667 = vrot.slane %v662, %v666
    %v677 = vunpack.c.l.b16 %v654
    %v678 = vunpack.c.l.b16 %v655
    %v679 = vunpack.c.l.b16 %v656
    %v680 = vunpack.c.l.b16 %v657
    %v681 = vunpack.c.l.b16 %v658
    %v682 = vunpack.c.l.b16 %v659
    %v683 = vunpack.c.l.b16 %v660
    %v684 = vunpack.c.l.b16 %v661
    %v685 = vpack.c.b16 %v678, %v677
    %v686 = vpack.c.b16 %v680, %v679
    %v687 = vpack.c.b16 %v682, %v681
    %v688 = vpack.c.b16 %v684, %v683
    %v694 = vsel %vm404, %v653, 0
    %696 = vmatprep.subr.bf16.mxu0 0
    %697 = vmatpush1.bf16.msra.mxu0 0
    %698 = vmatprep.subr.bf16.mxu0 0
    %699 = vmatpush1.bf16.msra.mxu0 0
    %700 = vmatprep.subr.bf16.mxu0 0
    %701 = vmatpush1.bf16.msra.mxu0 0
    %702 = vmatprep.subr.bf16.mxu0 0
    %703 = vmatpush1.bf16.msra.mxu0 0
    %704 = vmatprep.subr.bf16.mxu0 0
    %705 = vmatpush1.bf16.msra.mxu0 %v688
    %706 = vmatprep.subr.bf16.mxu0 0
    %707 = vmatpush1.bf16.msra.mxu0 %v687
    %708 = vmatprep.subr.bf16.mxu0 0
    %709 = vmatpush1.bf16.msra.mxu0 %v686
    %710 = vmatprep.subr.bf16.mxu0 0
    %711 = vmatpush1.bf16.msra.mxu0 %v685
    %712 = vmatprep.subr.bf16.mxu0 0
    %713 = vmatpush2.bf16.msra.mxu0 0
    %714 = vmatprep.subr.bf16.mxu0 0
    %715 = vmatpush2.bf16.msra.mxu0 0
    %716 = vmatprep.subr.bf16.mxu0 0
    %717 = vmatpush2.bf16.msra.mxu0 0
    %718 = vmatprep.subr.bf16.mxu0 0
    %719 = vmatpush2.bf16.msra.mxu0 0
    %720 = vmatprep.subr.bf16.mxu0 0
    %721 = vmatpush2.bf16.msra.mxu0 0
    %722 = vmatprep.subr.bf16.mxu0 0
    %723 = vmatpush2.bf16.msra.mxu0 0
    %724 = vmatprep.subr.bf16.mxu0 0
    %725 = vmatpush2.bf16.msra.mxu0 0
    %726 = vmatprep.subr.bf16.mxu0 0
    %727 = vmatpush2.bf16.msra.mxu0 0
    %728 = vmatprep.mubr.bf16.mxu0 0
    %729 = vmatmul.mubr.bf16.gmra.mxu0 %v694
    %v730 = vpop.f32.mrf.mxu0
    %v731 = vadd.f32 %v667, %v730
    %v732 = vpop.f32.mrf.mxu0
    %v733 = vpop.f32.mrf.mxu0
    %v734 = vadd.f32 %v667, %v733
    %v735 = vpop.f32.mrf.mxu0
    %736 = vdwg.mxu0
    %v737 = vxor.u32 %v731, 2147483648
    %v738 = vxor.u32 %v734, 2147483648
    %v739 = vmul.f32 %v737, 1.442695
    %v740 = vpow.pop %v739
    %v741 = vmul.f32 %v738, 1.442695
    %v742 = vpow.pop %v741
    %v743 = vadd.f32 %v740, 1.0
    %v744 = vadd.f32 %v742, 1.0
    %v745 = vrcp.pop %v743
    %v746 = vmul.f32 1.0, %v745
    %v747 = vrcp.pop %v744
    %v748 = vmul.f32 1.0, %v747
    %v749 = vsel %vm149, %v731, %v746
    %v750 = vsel %vm149, %v734, %v748
    %v751 = vpack.c.bf16 %v650, %v647
    %v752 = vpack.c.bf16 %v750, %v749
    %v755 = vunpack.c.l.b16 %v751
    %v756 = vunpack.c.l.b16 %v752
    %v757 = vunpack.c.h.b16 %v751
    %v758 = vunpack.c.h.b16 %v752
    %v759 = vpack.c.b16 %v756, %v755
    %v760 = vpack.c.b16 %v758, %v757
    %vm763 = vcmask 1043456
    %vm764 = vcmask 523268
    %vm765 = vmor %vm764, %vm763
    %766 = vst.msk [vmem:[#allocation16] sm:$0xff] %vm765, %v759
    %767 = vst.msk [vmem:[#allocation16 + $0x8] sm:$0xff] %vm765, %v760
    // Predicated region
    $region86: #{tpu_custom_call.1} parent=1 // pred_check
      _
    $region87: #{tpu_custom_call.1} parent=1 // pred_check_branch
      %769 = sbr.rel (0) target = $region89
    $region88: #{tpu_custom_call.1} parent=1 // pred_region
      %s771 = ssub.s32 128, 128
      %772 = vsyncadd [#allocation4], %s771
      %s773 = sshll.u32 [#allocation15], 4
      %s774 = int_to_ptr.vmem [resolvable:$true] %s773
      %779 = dma.vmem_to_hbm [thread:$0]  %s774, 128, %s14, [#allocation4], 64, 64, 4
    $region89: #{tpu_custom_call.1} parent=1 // pred_fallthru
      _
    // Predicated region
    $region90: #{tpu_custom_call.1} parent=1 // pred_check
      _
    $region91: #{tpu_custom_call.1} parent=1 // pred_check_branch
      %781 = sbr.rel (0) target = $region93
    $region92: #{tpu_custom_call.1} parent=1 // pred_region
      %s783 = ssub.s32 256, 256
      %784 = vsyncadd [#allocation17], %s783
      %s785 = sshll.u32 [#allocation16], 4
      %s786 = int_to_ptr.vmem [resolvable:$true] %s785
      %791 = dma.vmem_to_hbm [thread:$0]  %s786, 256, %s15, [#allocation17], 128, 128, 8
    $region93: #{tpu_custom_call.1} parent=1 // pred_fallthru
      _
    // Predicated region
    $region94: #{tpu_custom_call.1} parent=1 // pred_check
      _
    $region95: #{tpu_custom_call.1} parent=1 // pred_check_branch
      %793 = sbr.rel (0) target = $region97
    $region96: #{tpu_custom_call.1} parent=1 // pred_region
      %794 = dma.done [#allocation4], 128
    $region97: #{tpu_custom_call.1} parent=1 // pred_fallthru
      _
    // Predicated region
    $region98: #{tpu_custom_call.1} parent=1 // pred_check
      _
    $region99: #{tpu_custom_call.1} parent=1 // pred_check_branch
      %796 = sbr.rel (0) target = $region101
    $region100: #{tpu_custom_call.1} parent=1 // pred_region
      %797 = dma.done [#allocation17], 256
    $region101: #{tpu_custom_call.1} parent=1 // pred_fallthru
      _
    %798 = vsyncpa [#allocation3], 1
    %799 = vsyncpa [#allocation8], 1
    %800 = vsyncpa [#allocation11], 1
    %801 = vsyncpa [#allocation14], 1
    %802 = vsyncpa [#allocation4], 1
    %803 = vsyncpa [#allocation17], 1
    %804 = vsyncpa [#allocation5], 1

</llo_original>
